<compile_context>
chip_gen: v7x
topology: tpu7x:2x2x1
jax: 0.10.0
libtpu: 0.0.40
codegen_flags: <defaults>
</compile_context>

<pallas_src>
import jax
import jax.numpy as jnp
from jax.experimental import pallas as pl
from jax.experimental.pallas import tpu as pltpu


def _round_up(a: int, b: int) -> int:
    return ((a + b - 1) // b) * b


def _make_kernel(emit_pred: bool):
    def kernel(x_ref, mask_ref, w1_ref, b1_ref, w2_ref, b2_ref, nanbd_ref,
               *out_refs):
        x = x_ref[...]                       # (tm, P*N) f32, may contain NaN
        xc = jnp.nan_to_num(x)               # finite copy fed to the MXU

        # Per-original-row "has NaN" count, broadcast over that row's N-lane
        # chunk via a finite 0/1 block-diagonal ones matmul (keeps NaN off the
        # MXU so it cannot leak across the packed rows).
        nan_cnt = jnp.dot(jnp.isnan(x).astype(jnp.float32), nanbd_ref[...],
                          preferred_element_type=jnp.float32)

        h = jnp.dot(xc, w1_ref[...],
                    preferred_element_type=jnp.float32,
                    precision=jax.lax.Precision.HIGHEST) + b1_ref[...]
        h = jnp.maximum(h, 0.0)
        y = jnp.dot(h, w2_ref[...],
                    preferred_element_type=jnp.float32,
                    precision=jax.lax.Precision.HIGHEST) + b2_ref[...]
        # Rows whose input contained a NaN become all-NaN, exactly like the
        # PyTorch Linear applied to raw x.
        y = jnp.where(nan_cnt > 0.0, jnp.nan, y)

        not_m = 1.0 - mask_ref[...].astype(jnp.float32)   # int8 -> f32 on VPU
        if emit_pred:
            pred_ref, imp_ref = out_refs
            pred_ref[...] = y
        else:
            (imp_ref,) = out_refs
        imp_ref[...] = y * not_m + xc

    return kernel


def mlp_forward(x, mask, w1, b1, w2, b2, *, temporal=False, training=True,
                block_rows=2048):
    """Fused MLP imputer.

    x    : (B, S, N, 1) float, may contain NaN
    mask : (B, S, N, 1) bool  (True = observed)
    w1   : (H, N), b1 : (H,)   -- first Linear  (PyTorch weight layout)
    w2   : (N, H), b2 : (N,)   -- second Linear

    Returns (imputations, predictions) if training else imputations,
    each (B, S, N, 1) float32.
    """
    if temporal:
        x = jnp.swapaxes(x, 1, 2)
        mask = jnp.swapaxes(mask, 1, 2)

    B, S, N, C = x.shape
    assert C == 1
    H = w1.shape[0]
    M = B * S

    # ---- lane packing factor: fold P rows into the 128-lane axis ----------
    if N % 128 == 0:
        P = 1
    elif 128 % N == 0:
        P = 128 // N
    else:
        P = max(1, 128 // N)    # best effort for awkward N
    PN, PH = P * N, P * H

    # ---- row tiling in packed rows; pad M so tile size is free of B*S -----
    mp_needed = pl.cdiv(M, P)
    tm = min(max(1, block_rows // P), _round_up(mp_needed, 32))
    tm = max(32, _round_up(tm, 32))          # multiple of 32: int8-tile friendly
    mp_pad = _round_up(mp_needed, tm)
    m_pad = mp_pad * P
    grid = (mp_pad // tm,)

    x2 = x.reshape(M, N).astype(jnp.float32)
    m2 = mask.reshape(M, N).astype(jnp.int8)
    if m_pad != M:
        x2 = jnp.pad(x2, ((0, m_pad - M), (0, 0)))
        m2 = jnp.pad(m2, ((0, m_pad - M), (0, 0)), constant_values=1)
    x_packed = x2.reshape(mp_pad, PN)
    mask_packed = m2.reshape(mp_pad, PN)

    # ---- block-diagonal (lane-replicated) weights / biases / NaN broadcaster
    w1t = w1.astype(jnp.float32).T           # (N, H)
    w2t = w2.astype(jnp.float32).T           # (H, N)
    eye_p = jnp.eye(P, dtype=jnp.float32)
    w1bd = jnp.kron(eye_p, w1t)              # (P*N, P*H)
    w2bd = jnp.kron(eye_p, w2t)              # (P*H, P*N)
    b1r = jnp.tile(b1.astype(jnp.float32), P).reshape(1, PH)
    b2r = jnp.tile(b2.astype(jnp.float32), P).reshape(1, PN)
    nanbd = jnp.kron(eye_p, jnp.ones((N, N), jnp.float32))   # (P*N, P*N)

    def row_spec():
        return pl.BlockSpec((tm, PN), lambda i: (i, 0))

    in_specs = [
        row_spec(),                                   # x  (packed rows, f32)
        row_spec(),                                   # mask (packed rows, int8)
        pl.BlockSpec((PN, PH), lambda i: (0, 0)),     # W1 block-diag (resident)
        pl.BlockSpec((1, PH), lambda i: (0, 0)),      # b1
        pl.BlockSpec((PH, PN), lambda i: (0, 0)),     # W2 block-diag (resident)
        pl.BlockSpec((1, PN), lambda i: (0, 0)),      # b2
        pl.BlockSpec((PN, PN), lambda i: (0, 0)),     # NaN chunk-broadcast ones
    ]
    if training:
        out_shape = (jax.ShapeDtypeStruct((mp_pad, PN), jnp.float32),
                     jax.ShapeDtypeStruct((mp_pad, PN), jnp.float32))
        out_specs = (row_spec(), row_spec())
    else:
        out_shape = jax.ShapeDtypeStruct((mp_pad, PN), jnp.float32)
        out_specs = row_spec()

    outs = pl.pallas_call(
        _make_kernel(training),
        out_shape=out_shape,
        grid_spec=pltpu.PrefetchScalarGridSpec(
            num_scalar_prefetch=0,
            grid=grid,
            in_specs=in_specs,
            out_specs=out_specs,
        ),
        compiler_params=pltpu.CompilerParams(
            dimension_semantics=("parallel",)),
    )(x_packed, mask_packed, w1bd, b1r, w2bd, b2r, nanbd)

    def unpack(a):
        out = a.reshape(m_pad, N)[:M].reshape(B, S, N, 1)
        return jnp.swapaxes(out, 1, 2) if temporal else out

    if training:
        pred_p, imp_p = outs
        return unpack(imp_p), unpack(pred_p)
    return unpack(outs)


def _reference(x, mask, w1, b1, w2, b2):
    # pure-JAX reference of the PyTorch loop (temporal=False), for verification
    xs = x[..., 0]                                    # (B, S, N)
    h = jnp.maximum(
        jnp.einsum("bsn,hn->bsh", xs, w1,
                   precision=jax.lax.Precision.HIGHEST) + b1, 0.0)
    pred = jnp.einsum("bsh,nh->bsn", h, w2,
                      precision=jax.lax.Precision.HIGHEST) + b2
    pred = pred[..., None]
    imp = pred * (~mask).astype(jnp.float32) + jnp.nan_to_num(x)
    return imp, pred


if __name__ == "__main__":
    key = jax.random.PRNGKey(0)
    B, S, seq_dim, hidden_dim = 2, 8, 16, 32

    k_x, k_m, k_w1, k_b1, k_w2, k_b2 = jax.random.split(key, 6)

    x = jax.random.normal(k_x, (B, S, seq_dim, 1), dtype=jnp.float32)
    # sprinkle NaNs to exercise nan_to_num and PyTorch-style NaN-row propagation
    x = x.at[0, 0, 0, 0].set(jnp.nan).at[1, 3, 5, 0].set(jnp.nan)
    mask = jax.random.bernoulli(k_m, 0.3, (B, S, seq_dim, 1))

    # deterministic PyTorch-style Linear init: U(-1/sqrt(fan_in), 1/sqrt(fan_in))
    lim1 = 1.0 / jnp.sqrt(seq_dim)
    lim2 = 1.0 / jnp.sqrt(hidden_dim)
    w1 = jax.random.uniform(k_w1, (hidden_dim, seq_dim), minval=-lim1, maxval=lim1)
    b1 = jax.random.uniform(k_b1, (hidden_dim,), minval=-lim1, maxval=lim1)
    w2 = jax.random.uniform(k_w2, (seq_dim, hidden_dim), minval=-lim2, maxval=lim2)
    b2 = jax.random.uniform(k_b2, (seq_dim,), minval=-lim2, maxval=lim2)

    imp, pred = jax.block_until_ready(mlp_forward(x, mask, w1, b1, w2, b2))
    imp_ref, pred_ref = _reference(x, mask, w1, b1, w2, b2)

    assert imp.shape == (B, S, seq_dim, 1) and pred.shape == (B, S, seq_dim, 1)
    # NaN-poisoned rows must match the PyTorch/reference pattern exactly.
    assert bool(jnp.array_equal(jnp.isnan(pred), jnp.isnan(pred_ref)))
    assert bool(jnp.array_equal(jnp.isnan(imp), jnp.isnan(imp_ref)))
    # Numeric agreement on finite entries (NaN == NaN allowed).
    assert bool(jnp.allclose(pred, pred_ref, atol=1e-4, rtol=1e-4, equal_nan=True))
    assert bool(jnp.allclose(imp, imp_ref, atol=1e-4, rtol=1e-4, equal_nan=True))

    # eval-mode path: imputations only (one fewer HBM output stream)
    imp_eval = jax.block_until_ready(
        mlp_forward(x, mask, w1, b1, w2, b2, training=False))
    assert bool(jnp.allclose(imp_eval, imp, equal_nan=True))

    print("KERNEL_OK")
</pallas_src>

<mosaic_0001>
module attributes {stable_mosaic.version = 11 : i64} {
  func.func @kernel(%arg0: i32, %arg1: memref<32x128xf32, #tpu.memory_space<vmem>>, %arg2: memref<32x128xi8, #tpu.memory_space<vmem>>, %arg3: memref<128x256xf32, #tpu.memory_space<vmem>>, %arg4: memref<1x256xf32, #tpu.memory_space<vmem>>, %arg5: memref<256x128xf32, #tpu.memory_space<vmem>>, %arg6: memref<1x128xf32, #tpu.memory_space<vmem>>, %arg7: memref<128x128xf32, #tpu.memory_space<vmem>>, %arg8: memref<32x128xf32, #tpu.memory_space<vmem>>, %arg9: memref<32x128xf32, #tpu.memory_space<vmem>>) attributes {dimension_semantics = [#tpu.dimension_semantics<parallel>], iteration_bounds = array<i64: 1>, scalar_prefetch = 0 : i64, scratch_operands = 0 : i64, tpu.core_type = #tpu.core_type<tc>, window_params = [{transform_indices = @transform_0, window_bounds = array<i64: 32, 128>}, {transform_indices = @transform_1, window_bounds = array<i64: 32, 128>}, {pipeline_mode = #tpu.pipeline_mode<synchronous>, transform_indices = @transform_2, window_bounds = array<i64: 128, 256>}, {pipeline_mode = #tpu.pipeline_mode<synchronous>, transform_indices = @transform_3, window_bounds = array<i64: 1, 256>}, {pipeline_mode = #tpu.pipeline_mode<synchronous>, transform_indices = @transform_4, window_bounds = array<i64: 256, 128>}, {pipeline_mode = #tpu.pipeline_mode<synchronous>, transform_indices = @transform_5, window_bounds = array<i64: 1, 128>}, {pipeline_mode = #tpu.pipeline_mode<synchronous>, transform_indices = @transform_6, window_bounds = array<i64: 128, 128>}, {transform_indices = @transform_7, window_bounds = array<i64: 32, 128>}, {transform_indices = @transform_8, window_bounds = array<i64: 32, 128>}]} {
    %c0 = arith.constant 0 : index
    %c0_0 = arith.constant 0 : index
    %0 = vector.load %arg1[%c0, %c0_0] : memref<32x128xf32, #tpu.memory_space<vmem>>, vector<32x128xf32>
    %1 = arith.cmpf one, %0, %0 : vector<32x128xf32>
    %cst = arith.constant 0.000000e+00 : f32
    %2 = vector.broadcast %cst : f32 to vector<32x128xf32>
    %3 = arith.select %1, %2, %0 : vector<32x128xi1>, vector<32x128xf32>
    %cst_1 = arith.constant 0x7F800000 : f32
    %4 = vector.broadcast %cst_1 : f32 to vector<32x128xf32>
    %5 = arith.cmpf oeq, %3, %4 : vector<32x128xf32>
    %cst_2 = arith.constant 3.40282347E+38 : f32
    %6 = vector.broadcast %cst_2 : f32 to vector<32x128xf32>
    %7 = arith.select %5, %6, %3 : vector<32x128xi1>, vector<32x128xf32>
    %cst_3 = arith.constant 0xFF800000 : f32
    %8 = vector.broadcast %cst_3 : f32 to vector<32x128xf32>
    %9 = arith.cmpf oeq, %7, %8 : vector<32x128xf32>
    %cst_4 = arith.constant -3.40282347E+38 : f32
    %10 = vector.broadcast %cst_4 : f32 to vector<32x128xf32>
    %11 = arith.select %9, %10, %7 : vector<32x128xi1>, vector<32x128xf32>
    %12 = arith.cmpf one, %0, %0 : vector<32x128xf32>
    %13 = arith.extui %12 : vector<32x128xi1> to vector<32x128xi32>
    %14 = arith.sitofp %13 : vector<32x128xi32> to vector<32x128xf32>
    %c0_5 = arith.constant 0 : index
    %c0_6 = arith.constant 0 : index
    %15 = vector.load %arg7[%c0_5, %c0_6] : memref<128x128xf32, #tpu.memory_space<vmem>>, vector<128x128xf32>
    %cst_7 = arith.constant dense<0.000000e+00> : vector<32x128xf32>
    %16 = tpu.matmul %14, %15, %cst_7 {dimension_numbers = #tpu.dot_dimension_numbers<[1], [0], [0], [1], [0, 0, 1, 1], [], []>} : vector<32x128xf32>, vector<128x128xf32>, vector<32x128xf32> -> vector<32x128xf32>
    %c0_8 = arith.constant 0 : index
    %c0_9 = arith.constant 0 : index
    %17 = vector.load %arg3[%c0_8, %c0_9] : memref<128x256xf32, #tpu.memory_space<vmem>>, vector<128x256xf32>
    %cst_10 = arith.constant dense<0.000000e+00> : vector<32x256xf32>
    %18 = tpu.matmul %11, %17, %cst_10 {dimension_numbers = #tpu.dot_dimension_numbers<[1], [0], [0], [1], [0, 0, 1, 1], [], []>, precision = #tpu.contract_precision<fp32>} : vector<32x128xf32>, vector<128x256xf32>, vector<32x256xf32> -> vector<32x256xf32>
    %c0_11 = arith.constant 0 : index
    %c0_12 = arith.constant 0 : index
    %19 = vector.load %arg4[%c0_11, %c0_12] : memref<1x256xf32, #tpu.memory_space<vmem>>, vector<1x256xf32>
    %20 = vector.broadcast %19 : vector<1x256xf32> to vector<32x256xf32>
    %21 = arith.addf %18, %20 : vector<32x256xf32>
    %cst_13 = arith.constant 0.000000e+00 : f32
    %22 = vector.broadcast %cst_13 : f32 to vector<32x256xf32>
    %23 = arith.maximumf %21, %22 : vector<32x256xf32>
    %c0_14 = arith.constant 0 : index
    %c0_15 = arith.constant 0 : index
    %24 = vector.load %arg5[%c0_14, %c0_15] : memref<256x128xf32, #tpu.memory_space<vmem>>, vector<256x128xf32>
    %cst_16 = arith.constant dense<0.000000e+00> : vector<32x128xf32>
    %25 = tpu.matmul %23, %24, %cst_16 {dimension_numbers = #tpu.dot_dimension_numbers<[1], [0], [0], [1], [0, 0, 1, 1], [], []>, precision = #tpu.contract_precision<fp32>} : vector<32x256xf32>, vector<256x128xf32>, vector<32x128xf32> -> vector<32x128xf32>
    %c0_17 = arith.constant 0 : index
    %c0_18 = arith.constant 0 : index
    %26 = vector.load %arg6[%c0_17, %c0_18] : memref<1x128xf32, #tpu.memory_space<vmem>>, vector<1x128xf32>
    %27 = vector.broadcast %26 : vector<1x128xf32> to vector<32x128xf32>
    %28 = arith.addf %25, %27 : vector<32x128xf32>
    %cst_19 = arith.constant 0.000000e+00 : f32
    %29 = vector.broadcast %cst_19 : f32 to vector<32x128xf32>
    %30 = arith.cmpf ogt, %16, %29 : vector<32x128xf32>
    %cst_20 = arith.constant 0x7FC00000 : f32
    %31 = vector.broadcast %cst_20 : f32 to vector<32x128xf32>
    %32 = arith.select %30, %31, %28 : vector<32x128xi1>, vector<32x128xf32>
    %c0_21 = arith.constant 0 : index
    %c0_22 = arith.constant 0 : index
    %33 = vector.load %arg2[%c0_21, %c0_22] : memref<32x128xi8, #tpu.memory_space<vmem>>, vector<32x128xi8>
    %34 = arith.sitofp %33 : vector<32x128xi8> to vector<32x128xf32>
    %cst_23 = arith.constant 1.000000e+00 : f32
    %35 = vector.broadcast %cst_23 : f32 to vector<32x128xf32>
    %36 = arith.subf %35, %34 : vector<32x128xf32>
    %c0_24 = arith.constant 0 : index
    %c0_25 = arith.constant 0 : index
    %37 = vector.load %arg8[%c0_24, %c0_25] : memref<32x128xf32, #tpu.memory_space<vmem>>, vector<32x128xf32>
    tpu.vector_store %arg8[%c0_24, %c0_25], %32 {strides = array<i32>} : memref<32x128xf32, #tpu.memory_space<vmem>>, vector<32x128xf32>,
    %38 = arith.mulf %32, %36 : vector<32x128xf32>
    %39 = arith.addf %38, %11 : vector<32x128xf32>
    %c0_26 = arith.constant 0 : index
    %c0_27 = arith.constant 0 : index
    %40 = vector.load %arg9[%c0_26, %c0_27] : memref<32x128xf32, #tpu.memory_space<vmem>>, vector<32x128xf32>
    tpu.vector_store %arg9[%c0_26, %c0_27], %39 {strides = array<i32>} : memref<32x128xf32, #tpu.memory_space<vmem>>, vector<32x128xf32>,
    return
  }
  func.func @transform_0(%arg0: i32) -> (i32, i32) {
    %c0_i32 = arith.constant 0 : i32
    %c0_i32_0 = arith.constant 0 : i32
    return %arg0, %c0_i32 : i32, i32
  }
  func.func @transform_1(%arg0: i32) -> (i32, i32) {
    %c0_i32 = arith.constant 0 : i32
    %c0_i32_0 = arith.constant 0 : i32
    return %arg0, %c0_i32 : i32, i32
  }
  func.func @transform_2(%arg0: i32) -> (i32, i32) {
    %c0_i32 = arith.constant 0 : i32
    %c0_i32_0 = arith.constant 0 : i32
    %c0_i32_1 = arith.constant 0 : i32
    return %c0_i32, %c0_i32_0 : i32, i32
  }
  func.func @transform_3(%arg0: i32) -> (i32, i32) {
    %c0_i32 = arith.constant 0 : i32
    %c0_i32_0 = arith.constant 0 : i32
    %c0_i32_1 = arith.constant 0 : i32
    return %c0_i32, %c0_i32_0 : i32, i32
  }
  func.func @transform_4(%arg0: i32) -> (i32, i32) {
    %c0_i32 = arith.constant 0 : i32
    %c0_i32_0 = arith.constant 0 : i32
    %c0_i32_1 = arith.constant 0 : i32
    return %c0_i32, %c0_i32_0 : i32, i32
  }
  func.func @transform_5(%arg0: i32) -> (i32, i32) {
    %c0_i32 = arith.constant 0 : i32
    %c0_i32_0 = arith.constant 0 : i32
    %c0_i32_1 = arith.constant 0 : i32
    return %c0_i32, %c0_i32_0 : i32, i32
  }
  func.func @transform_6(%arg0: i32) -> (i32, i32) {
    %c0_i32 = arith.constant 0 : i32
    %c0_i32_0 = arith.constant 0 : i32
    %c0_i32_1 = arith.constant 0 : i32
    return %c0_i32, %c0_i32_0 : i32, i32
  }
  func.func @transform_7(%arg0: i32) -> (i32, i32) {
    %c0_i32 = arith.constant 0 : i32
    %c0_i32_0 = arith.constant 0 : i32
    return %arg0, %c0_i32 : i32, i32
  }
  func.func @transform_8(%arg0: i32) -> (i32, i32) {
    %c0_i32 = arith.constant 0 : i32
    %c0_i32_0 = arith.constant 0 : i32
    return %arg0, %c0_i32 : i32, i32
  }
}

</mosaic_0001>

<llo_original>
// kernel: tpu_custom_call.1
$region0: #{tpu_custom_call.1}
  #allocation0 [shape = 'u32[]', space=smem, size = 0x4, offset = 0x4, fixed_abs, tag = 'smem constant byte address 0x4 - core index']
  #allocation1 [shape = 'u32[144,128]{1,0:T(1,128)}', space=vmem, size = 0x12000, scoped, tag = 'internal scratch']
  %s0 = inlined_call_operand.hbm [shape: f32[32,128], index: 0, kind: input, shape index: {}]
  %s1 = inlined_call_operand.hbm [shape: s8[32,128], index: 1, kind: input, shape index: {}]
  %s2 = inlined_call_operand.hbm [shape: f32[128,256], index: 2, kind: input, shape index: {}]
  %s3 = inlined_call_operand.vmem [shape: f32[1,256], index: 3, kind: input, shape index: {}]
  %s4 = inlined_call_operand.hbm [shape: f32[256,128], index: 4, kind: input, shape index: {}]
  %s5 = inlined_call_operand.vmem [shape: f32[1,128], index: 5, kind: input, shape index: {}]
  %s6 = inlined_call_operand.hbm [shape: f32[128,128], index: 6, kind: input, shape index: {}]
  %s7 = inlined_call_operand.hbm [shape: f32[32,128], index: 7, kind: output, shape index: {0}]
  %s8 = inlined_call_operand.hbm [shape: f32[32,128], index: 8, kind: output, shape index: {1}]
  %9 = xla_tuple %s7, %s8
  %s10 = sld [smem:[#allocation0]]
  $region66: #{tpu_custom_call.1} parent=0
    _
  %s12 = ssub.s32 1, %s10
  %s13 = scalar_select 0, %s12, %s10
  $region1: #{tpu_custom_call.1} parent=0
    #allocation2 [shape = 'u8[16384]{0}', space=vmem, size = 0x4000, scoped, tag = 'input window, operand 0, single buffered']
    #allocation3 [shape = 's32[1]{0}', space=sflag, size = 0x4, scoped, tag = 'scoped memory for tpu_custom_call.1']
    #allocation4 [shape = 's32[1]{0}', space=sflag, size = 0x4, scoped, tag = 'scoped memory for tpu_custom_call.1']
    #allocation5 [shape = 'u8[4096]{0}', space=vmem, size = 0x1000, scoped, tag = 'input window, operand 1, single buffered']
    #allocation6 [shape = 's32[1]{0}', space=sflag, size = 0x4, scoped, tag = 'scoped memory for tpu_custom_call.1']
    #allocation7 [shape = 'u8[131072]{0}', space=vmem, size = 0x20000, scoped, tag = 'input window, operand 2, single buffered']
    #allocation8 [shape = 'u8[131072]{0}', space=vmem, size = 0x20000, scoped, tag = 'input window, operand 4, single buffered']
    #allocation9 [shape = 's32[1]{0}', space=sflag, size = 0x4, scoped, tag = 'scoped memory for tpu_custom_call.1']
    #allocation10 [shape = 'u8[65536]{0}', space=vmem, size = 0x10000, scoped, tag = 'input window, operand 6, single buffered']
    #allocation11 [shape = 'u8[16384]{0}', space=vmem, size = 0x4000, scoped, tag = 'output window, operand 0, single buffered']
    #allocation12 [shape = 'u8[16384]{0}', space=vmem, size = 0x4000, scoped, tag = 'output window, operand 1, single buffered']
    #allocation13 [shape = 's32[1]{0}', space=sflag, size = 0x4, scoped, tag = 'scoped memory for tpu_custom_call.1']
    %14 = vsyncpa [#allocation3], 0
    %15 = vsyncpa [#allocation6], 0
    %16 = vsyncpa [#allocation9], 0
    %17 = vsyncpa [#allocation4], 0
    %18 = vsyncpa [#allocation13], 0
    // Predicated region
    $region2: #{tpu_custom_call.1} parent=1 // pred_check
      _
    $region3: #{tpu_custom_call.1} parent=1 // pred_check_branch
      %20 = sbr.rel (0) target = $region5
    $region4: #{tpu_custom_call.1} parent=1 // pred_region
      %s22 = ssub.s32 512, 512
      %23 = vsyncadd [#allocation3], %s22
      %s24 = sshll.u32 [#allocation2], 4
      %s25 = int_to_ptr.vmem [resolvable:$true] %s24
      %30 = dma.hbm_to_vmem [thread:$0]  %s0, 512, %s25, [#allocation3], 128, 128, 8
    $region5: #{tpu_custom_call.1} parent=1 // pred_fallthru
      _
    // Predicated region
    $region6: #{tpu_custom_call.1} parent=1 // pred_check
      _
    $region7: #{tpu_custom_call.1} parent=1 // pred_check_branch
      %32 = sbr.rel (0) target = $region9
    $region8: #{tpu_custom_call.1} parent=1 // pred_region
      %s34 = ssub.s32 128, 128
      %35 = vsyncadd [#allocation6], %s34
      %s37 = sshll.u32 [#allocation5], 4
      %s38 = int_to_ptr.vmem [resolvable:$true] %s37
      %40 = dma.hbm_to_vmem [thread:$0]  %s1, 128, %s38, [#allocation6]
    $region9: #{tpu_custom_call.1} parent=1 // pred_fallthru
      _
    // Predicated region
    $region10: #{tpu_custom_call.1} parent=1 // pred_check
      _
    $region11: #{tpu_custom_call.1} parent=1 // pred_check_branch
      %42 = sbr.rel (0) target = $region13
    $region12: #{tpu_custom_call.1} parent=1 // pred_region
      %s44 = ssub.s32 4096, 4096
      %45 = vsyncadd [#allocation6], %s44
      %s46 = sshll.u32 [#allocation7], 4
      %s47 = int_to_ptr.vmem [resolvable:$true] %s46
      %52 = dma.hbm_to_vmem [thread:$0]  %s2, 4096, %s47, [#allocation6], 256, 256, 16
    $region13: #{tpu_custom_call.1} parent=1 // pred_fallthru
      _
    // Predicated region
    $region14: #{tpu_custom_call.1} parent=1 // pred_check
      _
    $region15: #{tpu_custom_call.1} parent=1 // pred_check_branch
      %54 = sbr.rel (0) target = $region17
    $region16: #{tpu_custom_call.1} parent=1 // pred_region
      _
    $region17: #{tpu_custom_call.1} parent=1 // pred_fallthru
      _
    // Predicated region
    $region18: #{tpu_custom_call.1} parent=1 // pred_check
      _
    $region19: #{tpu_custom_call.1} parent=1 // pred_check_branch
      %56 = sbr.rel (0) target = $region21
    $region20: #{tpu_custom_call.1} parent=1 // pred_region
      %s58 = ssub.s32 4096, 4096
      %59 = vsyncadd [#allocation9], %s58
      %s60 = sshll.u32 [#allocation8], 4
      %s61 = int_to_ptr.vmem [resolvable:$true] %s60
      %66 = dma.hbm_to_vmem [thread:$0]  %s4, 4096, %s61, [#allocation9], 128, 128, 8
    $region21: #{tpu_custom_call.1} parent=1 // pred_fallthru
      _
    // Predicated region
    $region22: #{tpu_custom_call.1} parent=1 // pred_check
      _
    $region23: #{tpu_custom_call.1} parent=1 // pred_check_branch
      %68 = sbr.rel (0) target = $region25
    $region24: #{tpu_custom_call.1} parent=1 // pred_region
      _
    $region25: #{tpu_custom_call.1} parent=1 // pred_fallthru
      _
    // Predicated region
    $region26: #{tpu_custom_call.1} parent=1 // pred_check
      _
    $region27: #{tpu_custom_call.1} parent=1 // pred_check_branch
      %70 = sbr.rel (0) target = $region29
    $region28: #{tpu_custom_call.1} parent=1 // pred_region
      %s72 = ssub.s32 2048, 2048
      %73 = vsyncadd [#allocation9], %s72
      %s74 = sshll.u32 [#allocation10], 4
      %s75 = int_to_ptr.vmem [resolvable:$true] %s74
      %80 = dma.hbm_to_vmem [thread:$0]  %s6, 2048, %s75, [#allocation9], 128, 128, 8
    $region29: #{tpu_custom_call.1} parent=1 // pred_fallthru
      _
    // Predicated region
    $region30: #{tpu_custom_call.1} parent=1 // pred_check
      _
    $region31: #{tpu_custom_call.1} parent=1 // pred_check_branch
      %82 = sbr.rel (0) target = $region33
    $region32: #{tpu_custom_call.1} parent=1 // pred_region
      %83 = dma.done [#allocation3], 512
    $region33: #{tpu_custom_call.1} parent=1 // pred_fallthru
      _
    // Predicated region
    $region34: #{tpu_custom_call.1} parent=1 // pred_check
      _
    $region35: #{tpu_custom_call.1} parent=1 // pred_check_branch
      %85 = sbr.rel (0) target = $region37
    $region36: #{tpu_custom_call.1} parent=1 // pred_region
      %86 = dma.done [#allocation6], 128
    $region37: #{tpu_custom_call.1} parent=1 // pred_fallthru
      _
    // Predicated region
    $region38: #{tpu_custom_call.1} parent=1 // pred_check
      _
    $region39: #{tpu_custom_call.1} parent=1 // pred_check_branch
      %88 = sbr.rel (0) target = $region41
    $region40: #{tpu_custom_call.1} parent=1 // pred_region
      %89 = dma.done [#allocation6], 4096
    $region41: #{tpu_custom_call.1} parent=1 // pred_fallthru
      _
    // Predicated region
    $region42: #{tpu_custom_call.1} parent=1 // pred_check
      _
    $region43: #{tpu_custom_call.1} parent=1 // pred_check_branch
      %91 = sbr.rel (0) target = $region45
    $region44: #{tpu_custom_call.1} parent=1 // pred_region
      %92 = dma.done [#allocation9], 4096
    $region45: #{tpu_custom_call.1} parent=1 // pred_fallthru
      _
    // Predicated region
    $region46: #{tpu_custom_call.1} parent=1 // pred_check
      _
    $region47: #{tpu_custom_call.1} parent=1 // pred_check_branch
      %94 = sbr.rel (0) target = $region49
    $region48: #{tpu_custom_call.1} parent=1 // pred_region
      %95 = dma.done [#allocation9], 2048
    $region49: #{tpu_custom_call.1} parent=1 // pred_fallthru
      _
    %v96 = vld [vmem:[#allocation2] sm:$0xff]
    %v97 = vld [vmem:[#allocation2 + $0x8] sm:$0xff]
    %v98 = vld [vmem:[#allocation2 + $0x10] sm:$0xff]
    %v99 = vld [vmem:[#allocation2 + $0x18] sm:$0xff]
    %vm100 = vcmp.ne.f32.partialorder %v96, %v96
    %vm101 = vcmp.ne.f32.partialorder %v97, %v97
    %vm102 = vcmp.ne.f32.partialorder %v98, %v98
    %vm103 = vcmp.ne.f32.partialorder %v99, %v99
    %v104 = vsel %vm100, 0.0, %v96
    %v105 = vsel %vm101, 0.0, %v97
    %v106 = vsel %vm102, 0.0, %v98
    %v107 = vsel %vm103, 0.0, %v99
    %vm108 = vcmp.eq.f32.partialorder %v104, inf
    %vm109 = vcmp.eq.f32.partialorder %v105, inf
    %vm110 = vcmp.eq.f32.partialorder %v106, inf
    %vm111 = vcmp.eq.f32.partialorder %v107, inf
    %v112 = vsel %vm108, 3.4028235e+38, %v104
    %v113 = vsel %vm109, 3.4028235e+38, %v105
    %v114 = vsel %vm110, 3.4028235e+38, %v106
    %v115 = vsel %vm111, 3.4028235e+38, %v107
    %vm116 = vcmp.eq.f32.partialorder %v112, -inf
    %vm117 = vcmp.eq.f32.partialorder %v113, -inf
    %vm118 = vcmp.eq.f32.partialorder %v114, -inf
    %vm119 = vcmp.eq.f32.partialorder %v115, -inf
    %v120 = vsel %vm116, -3.4028235e+38, %v112
    %v121 = vsel %vm117, -3.4028235e+38, %v113
    %v122 = vsel %vm118, -3.4028235e+38, %v114
    %v123 = vsel %vm119, -3.4028235e+38, %v115
    %v124 = vsel %vm100, 1, 0
    %v125 = vsel %vm101, 1, 0
    %v126 = vsel %vm102, 1, 0
    %v127 = vsel %vm103, 1, 0
    %v128 = vcvt.s32.f32 %v124
    %v129 = vcvt.s32.f32 %v125
    %v130 = vcvt.s32.f32 %v126
    %v131 = vcvt.s32.f32 %v127
    %v132 = vld [vmem:[#allocation10] sm:$0xff]
    %v133 = vld [vmem:[#allocation10 + $0x8] sm:$0xff]
    %v134 = vld [vmem:[#allocation10 + $0x10] sm:$0xff]
    %v135 = vld [vmem:[#allocation10 + $0x18] sm:$0xff]
    %v136 = vld [vmem:[#allocation10 + $0x20] sm:$0xff]
    %v137 = vld [vmem:[#allocation10 + $0x28] sm:$0xff]
    %v138 = vld [vmem:[#allocation10 + $0x30] sm:$0xff]
    %v139 = vld [vmem:[#allocation10 + $0x38] sm:$0xff]
    %v140 = vld [vmem:[#allocation10 + $0x40] sm:$0xff]
    %v141 = vld [vmem:[#allocation10 + $0x48] sm:$0xff]
    %v142 = vld [vmem:[#allocation10 + $0x50] sm:$0xff]
    %v143 = vld [vmem:[#allocation10 + $0x58] sm:$0xff]
    %v144 = vld [vmem:[#allocation10 + $0x60] sm:$0xff]
    %v145 = vld [vmem:[#allocation10 + $0x68] sm:$0xff]
    %v146 = vld [vmem:[#allocation10 + $0x70] sm:$0xff]
    %v147 = vld [vmem:[#allocation10 + $0x78] sm:$0xff]
    %148 = vmatprep.subr.mxu0 0.0
    %149 = vmatpush1.msra.mxu0 %v132
    %150 = vmatprep.subr.mxu0 0.0
    %151 = vmatpush1.msra.mxu0 %v133
    %152 = vmatprep.subr.mxu0 0.0
    %153 = vmatpush1.msra.mxu0 %v134
    %154 = vmatprep.subr.mxu0 0.0
    %155 = vmatpush1.msra.mxu0 %v135
    %156 = vmatprep.subr.mxu0 0.0
    %157 = vmatpush1.msra.mxu0 %v136
    %158 = vmatprep.subr.mxu0 0.0
    %159 = vmatpush1.msra.mxu0 %v137
    %160 = vmatprep.subr.mxu0 0.0
    %161 = vmatpush1.msra.mxu0 %v138
    %162 = vmatprep.subr.mxu0 0.0
    %163 = vmatpush1.msra.mxu0 %v139
    %164 = vmatprep.subr.mxu0 0.0
    %165 = vmatpush1.msra.mxu0 %v140
    %166 = vmatprep.subr.mxu0 0.0
    %167 = vmatpush1.msra.mxu0 %v141
    %168 = vmatprep.subr.mxu0 0.0
    %169 = vmatpush1.msra.mxu0 %v142
    %170 = vmatprep.subr.mxu0 0.0
    %171 = vmatpush1.msra.mxu0 %v143
    %172 = vmatprep.subr.mxu0 0.0
    %173 = vmatpush1.msra.mxu0 %v144
    %174 = vmatprep.subr.mxu0 0.0
    %175 = vmatpush1.msra.mxu0 %v145
    %176 = vmatprep.subr.mxu0 0.0
    %177 = vmatpush1.msra.mxu0 %v146
    %178 = vmatprep.subr.mxu0 0.0
    %179 = vmatpush1.msra.mxu0 %v147
    %180 = vmatprep.subr.mxu0 0.0
    %181 = vmatpush1.msra.mxu0 0.0
    %182 = vmatprep.subr.mxu0 0.0
    %183 = vmatpush1.msra.mxu0 0.0
    %184 = vmatprep.subr.mxu0 0.0
    %185 = vmatpush1.msra.mxu0 0.0
    %186 = vmatprep.subr.mxu0 0.0
    %187 = vmatpush1.msra.mxu0 0.0
    %188 = vmatprep.subr.mxu0 0.0
    %189 = vmatpush1.msra.mxu0 0.0
    %190 = vmatprep.subr.mxu0 0.0
    %191 = vmatpush1.msra.mxu0 0.0
    %192 = vmatprep.subr.mxu0 0.0
    %193 = vmatpush1.msra.mxu0 0.0
    %194 = vmatprep.subr.mxu0 0.0
    %195 = vmatpush1.msra.mxu0 0.0
    %196 = vmatprep.subr.mxu0 0.0
    %197 = vmatpush1.msra.mxu0 0.0
    %198 = vmatprep.subr.mxu0 0.0
    %199 = vmatpush1.msra.mxu0 0.0
    %200 = vmatprep.subr.mxu0 0.0
    %201 = vmatpush1.msra.mxu0 0.0
    %202 = vmatprep.subr.mxu0 0.0
    %203 = vmatpush1.msra.mxu0 0.0
    %204 = vmatprep.subr.mxu0 0.0
    %205 = vmatpush1.msra.mxu0 0.0
    %206 = vmatprep.subr.mxu0 0.0
    %207 = vmatpush1.msra.mxu0 0.0
    %208 = vmatprep.subr.mxu0 0.0
    %209 = vmatpush1.msra.mxu0 0.0
    %210 = vmatprep.subr.mxu0 0.0
    %211 = vmatpush1.msra.mxu0 0.0
    %212 = vmatprep.mubr.f32.mxu0 0.0
    %213 = vmatmul.mubr.f32.gmra.mrb[0].mxu0 %v128
    %v214 = vpop.f32.mrb[0].mxu0
    %v215 = vadd.f32 0.0, %v214
    %v216 = vpop.f32.mrb[0].mxu0
    %217 = vmatprep.mubr.f32.mxu0 0.0
    %218 = vmatmul.mubr.f32.gmra.mrb[0].mxu0 %v129
    %v219 = vpop.f32.mrb[0].mxu0
    %v220 = vadd.f32 0.0, %v219
    %v221 = vpop.f32.mrb[0].mxu0
    %222 = vmatprep.mubr.f32.mxu0 0.0
    %223 = vmatmul.mubr.f32.gmra.mrb[0].mxu0 %v130
    %v224 = vpop.f32.mrb[0].mxu0
    %v225 = vadd.f32 0.0, %v224
    %v226 = vpop.f32.mrb[0].mxu0
    %227 = vmatprep.mubr.f32.mxu0 0.0
    %228 = vmatmul.mubr.f32.gmra.mrb[0].mxu0 %v131
    %v229 = vpop.f32.mrb[0].mxu0
    %v230 = vadd.f32 0.0, %v229
    %v231 = vpop.f32.mrb[0].mxu0
    %232 = vdwg.mxu0
    %v233 = vld [vmem:[#allocation7] sm:$0xff]
    %v234 = vld [vmem:[#allocation7 + $0x8] sm:$0xff]
    %v235 = vld [vmem:[#allocation7 + $0x10] sm:$0xff]
    %v236 = vld [vmem:[#allocation7 + $0x18] sm:$0xff]
    %v237 = vld [vmem:[#allocation7 + $0x20] sm:$0xff]
    %v238 = vld [vmem:[#allocation7 + $0x28] sm:$0xff]
    %v239 = vld [vmem:[#allocation7 + $0x30] sm:$0xff]
    %v240 = vld [vmem:[#allocation7 + $0x38] sm:$0xff]
    %v241 = vld [vmem:[#allocation7 + $0x40] sm:$0xff]
    %v242 = vld [vmem:[#allocation7 + $0x48] sm:$0xff]
    %v243 = vld [vmem:[#allocation7 + $0x50] sm:$0xff]
    %v244 = vld [vmem:[#allocation7 + $0x58] sm:$0xff]
    %v245 = vld [vmem:[#allocation7 + $0x60] sm:$0xff]
    %v246 = vld [vmem:[#allocation7 + $0x68] sm:$0xff]
    %v247 = vld [vmem:[#allocation7 + $0x70] sm:$0xff]
    %v248 = vld [vmem:[#allocation7 + $0x78] sm:$0xff]
    %v249 = vld [vmem:[#allocation7 + $0x80] sm:$0xff]
    %v250 = vld [vmem:[#allocation7 + $0x88] sm:$0xff]
    %v251 = vld [vmem:[#allocation7 + $0x90] sm:$0xff]
    %v252 = vld [vmem:[#allocation7 + $0x98] sm:$0xff]
    %v253 = vld [vmem:[#allocation7 + $0xa0] sm:$0xff]
    %v254 = vld [vmem:[#allocation7 + $0xa8] sm:$0xff]
    %v255 = vld [vmem:[#allocation7 + $0xb0] sm:$0xff]
    %v256 = vld [vmem:[#allocation7 + $0xb8] sm:$0xff]
    %v257 = vld [vmem:[#allocation7 + $0xc0] sm:$0xff]
    %v258 = vld [vmem:[#allocation7 + $0xc8] sm:$0xff]
    %v259 = vld [vmem:[#allocation7 + $0xd0] sm:$0xff]
    %v260 = vld [vmem:[#allocation7 + $0xd8] sm:$0xff]
    %v261 = vld [vmem:[#allocation7 + $0xe0] sm:$0xff]
    %v262 = vld [vmem:[#allocation7 + $0xe8] sm:$0xff]
    %v263 = vld [vmem:[#allocation7 + $0xf0] sm:$0xff]
    %v264 = vld [vmem:[#allocation7 + $0xf8] sm:$0xff]
    %v265 = vld [vmem:[%s3] sm:$0x3]
    %v267 = vlaneseq
    %v268 = vshrl.u32 %v267, 7
    %v269 = vsub.s32 0, %v268
    %v270 = vrot.slane %v265, %v269
    %v271 = vlaneseq
    %v272 = vshrl.u32 %v271, 7
    %v273 = vsub.s32 1, %v272
    %v274 = vrot.slane %v265, %v273
    %v277 = vand.u32 %v234, 4294901760
    %278 = vmatprep.subr.mxu0 %v277
    %v279 = vand.u32 %v233, 4294901760
    %280 = vmatpush1.msra.mxu0 %v279
    %v281 = vand.u32 %v236, 4294901760
    %282 = vmatprep.subr.mxu0 %v281
    %v283 = vand.u32 %v235, 4294901760
    %284 = vmatpush1.msra.mxu0 %v283
    %v285 = vand.u32 %v238, 4294901760
    %286 = vmatprep.subr.mxu0 %v285
    %v287 = vand.u32 %v237, 4294901760
    %288 = vmatpush1.msra.mxu0 %v287
    %v289 = vand.u32 %v240, 4294901760
    %290 = vmatprep.subr.mxu0 %v289
    %v291 = vand.u32 %v239, 4294901760
    %292 = vmatpush1.msra.mxu0 %v291
    %v293 = vand.u32 %v242, 4294901760
    %294 = vmatprep.subr.mxu0 %v293
    %v295 = vand.u32 %v241, 4294901760
    %296 = vmatpush1.msra.mxu0 %v295
    %v297 = vand.u32 %v244, 4294901760
    %298 = vmatprep.subr.mxu0 %v297
    %v299 = vand.u32 %v243, 4294901760
    %300 = vmatpush1.msra.mxu0 %v299
    %v301 = vand.u32 %v246, 4294901760
    %302 = vmatprep.subr.mxu0 %v301
    %v303 = vand.u32 %v245, 4294901760
    %304 = vmatpush1.msra.mxu0 %v303
    %v305 = vand.u32 %v248, 4294901760
    %306 = vmatprep.subr.mxu0 %v305
    %v307 = vand.u32 %v247, 4294901760
    %308 = vmatpush1.msra.mxu0 %v307
    %v309 = vand.u32 %v250, 4294901760
    %310 = vmatprep.subr.mxu0 %v309
    %v311 = vand.u32 %v249, 4294901760
    %312 = vmatpush1.msra.mxu0 %v311
    %v313 = vand.u32 %v252, 4294901760
    %314 = vmatprep.subr.mxu0 %v313
    %v315 = vand.u32 %v251, 4294901760
    %316 = vmatpush1.msra.mxu0 %v315
    %v317 = vand.u32 %v254, 4294901760
    %318 = vmatprep.subr.mxu0 %v317
    %v319 = vand.u32 %v253, 4294901760
    %320 = vmatpush1.msra.mxu0 %v319
    %v321 = vand.u32 %v256, 4294901760
    %322 = vmatprep.subr.mxu0 %v321
    %v323 = vand.u32 %v255, 4294901760
    %324 = vmatpush1.msra.mxu0 %v323
    %v325 = vand.u32 %v258, 4294901760
    %326 = vmatprep.subr.mxu0 %v325
    %v327 = vand.u32 %v257, 4294901760
    %328 = vmatpush1.msra.mxu0 %v327
    %v329 = vand.u32 %v260, 4294901760
    %330 = vmatprep.subr.mxu0 %v329
    %v331 = vand.u32 %v259, 4294901760
    %332 = vmatpush1.msra.mxu0 %v331
    %v333 = vand.u32 %v262, 4294901760
    %334 = vmatprep.subr.mxu0 %v333
    %v335 = vand.u32 %v261, 4294901760
    %336 = vmatpush1.msra.mxu0 %v335
    %v337 = vand.u32 %v264, 4294901760
    %338 = vmatprep.subr.mxu0 %v337
    %v339 = vand.u32 %v263, 4294901760
    %340 = vmatpush1.msra.mxu0 %v339
    %341 = vmatprep.subr.mxu0 0.0
    %342 = vmatpush1.msra.mxu0 0.0
    %343 = vmatprep.subr.mxu0 0.0
    %344 = vmatpush1.msra.mxu0 0.0
    %345 = vmatprep.subr.mxu0 0.0
    %346 = vmatpush1.msra.mxu0 0.0
    %347 = vmatprep.subr.mxu0 0.0
    %348 = vmatpush1.msra.mxu0 0.0
    %349 = vmatprep.subr.mxu0 0.0
    %350 = vmatpush1.msra.mxu0 0.0
    %351 = vmatprep.subr.mxu0 0.0
    %352 = vmatpush1.msra.mxu0 0.0
    %353 = vmatprep.subr.mxu0 0.0
    %354 = vmatpush1.msra.mxu0 0.0
    %355 = vmatprep.subr.mxu0 0.0
    %356 = vmatpush1.msra.mxu0 0.0
    %357 = vmatprep.subr.mxu0 0.0
    %358 = vmatpush1.msra.mxu0 0.0
    %359 = vmatprep.subr.mxu0 0.0
    %360 = vmatpush1.msra.mxu0 0.0
    %361 = vmatprep.subr.mxu0 0.0
    %362 = vmatpush1.msra.mxu0 0.0
    %363 = vmatprep.subr.mxu0 0.0
    %364 = vmatpush1.msra.mxu0 0.0
    %365 = vmatprep.subr.mxu0 0.0
    %366 = vmatpush1.msra.mxu0 0.0
    %367 = vmatprep.subr.mxu0 0.0
    %368 = vmatpush1.msra.mxu0 0.0
    %369 = vmatprep.subr.mxu0 0.0
    %370 = vmatpush1.msra.mxu0 0.0
    %371 = vmatprep.subr.mxu0 0.0
    %372 = vmatpush1.msra.mxu0 0.0
    %373 = vmatprep.mubr.f32.mxu0 0.0
    %v374 = vand.u32 %v120, 4294901760
    %v375 = vsub.f32 %v120, %v374
    %v376 = vand.u32 %v375, 4294901760
    %v377 = vsub.f32 %v375, %v376
    %v378 = vand.u32 %v377, 4294901760
    %379 = vmatmul.mubr.f32.gmra.mrb[0].mxu0 %v378
    %v380 = vpop.f32.mrb[0].mxu0
    %v381 = vadd.f32 %v270, %v380
    %v382 = vpop.f32.mrb[0].mxu0
    %v383 = vadd.f32 %v274, %v382
    %384 = vmatprep.mubr.f32.mxu0 0.0
    %v385 = vand.u32 %v121, 4294901760
    %v386 = vsub.f32 %v121, %v385
    %v387 = vand.u32 %v386, 4294901760
    %v388 = vsub.f32 %v386, %v387
    %v389 = vand.u32 %v388, 4294901760
    %390 = vmatmul.mubr.f32.gmra.mrb[0].mxu0 %v389
    %v391 = vpop.f32.mrb[0].mxu0
    %v392 = vadd.f32 %v270, %v391
    %v393 = vpop.f32.mrb[0].mxu0
    %v394 = vadd.f32 %v274, %v393
    %395 = vmatprep.mubr.f32.mxu0 0.0
    %v396 = vand.u32 %v122, 4294901760
    %v397 = vsub.f32 %v122, %v396
    %v398 = vand.u32 %v397, 4294901760
    %v399 = vsub.f32 %v397, %v398
    %v400 = vand.u32 %v399, 4294901760
    %401 = vmatmul.mubr.f32.gmra.mrb[0].mxu0 %v400
    %v402 = vpop.f32.mrb[0].mxu0
    %v403 = vadd.f32 %v270, %v402
    %v404 = vpop.f32.mrb[0].mxu0
    %v405 = vadd.f32 %v274, %v404
    %406 = vmatprep.mubr.f32.mxu0 0.0
    %v407 = vand.u32 %v123, 4294901760
    %v408 = vsub.f32 %v123, %v407
    %v409 = vand.u32 %v408, 4294901760
    %v410 = vsub.f32 %v408, %v409
    %v411 = vand.u32 %v410, 4294901760
    %412 = vmatmul.mubr.f32.gmra.mrb[0].mxu0 %v411
    %v413 = vpop.f32.mrb[0].mxu0
    %v414 = vadd.f32 %v270, %v413
    %v415 = vpop.f32.mrb[0].mxu0
    %v416 = vadd.f32 %v274, %v415
    %417 = vdwg.mxu0
    %v418 = vand.u32 %v234, 4294901760
    %v419 = vsub.f32 %v234, %v418
    %v420 = vand.u32 %v419, 4294901760
    %v421 = vsub.f32 %v419, %v420
    %v422 = vand.u32 %v421, 4294901760
    %423 = vmatprep.subr.mxu0 %v422
    %v424 = vand.u32 %v233, 4294901760
    %v425 = vsub.f32 %v233, %v424
    %v426 = vand.u32 %v425, 4294901760
    %v427 = vsub.f32 %v425, %v426
    %v428 = vand.u32 %v427, 4294901760
    %429 = vmatpush1.msra.mxu0 %v428
    %v430 = vand.u32 %v236, 4294901760
    %v431 = vsub.f32 %v236, %v430
    %v432 = vand.u32 %v431, 4294901760
    %v433 = vsub.f32 %v431, %v432
    %v434 = vand.u32 %v433, 4294901760
    %435 = vmatprep.subr.mxu0 %v434
    %v436 = vand.u32 %v235, 4294901760
    %v437 = vsub.f32 %v235, %v436
    %v438 = vand.u32 %v437, 4294901760
    %v439 = vsub.f32 %v437, %v438
    %v440 = vand.u32 %v439, 4294901760
    %441 = vmatpush1.msra.mxu0 %v440
    %v442 = vand.u32 %v238, 4294901760
    %v443 = vsub.f32 %v238, %v442
    %v444 = vand.u32 %v443, 4294901760
    %v445 = vsub.f32 %v443, %v444
    %v446 = vand.u32 %v445, 4294901760
    %447 = vmatprep.subr.mxu0 %v446
    %v448 = vand.u32 %v237, 4294901760
    %v449 = vsub.f32 %v237, %v448
    %v450 = vand.u32 %v449, 4294901760
    %v451 = vsub.f32 %v449, %v450
    %v452 = vand.u32 %v451, 4294901760
    %453 = vmatpush1.msra.mxu0 %v452
    %v454 = vand.u32 %v240, 4294901760
    %v455 = vsub.f32 %v240, %v454
    %v456 = vand.u32 %v455, 4294901760
    %v457 = vsub.f32 %v455, %v456
    %v458 = vand.u32 %v457, 4294901760
    %459 = vmatprep.subr.mxu0 %v458
    %v460 = vand.u32 %v239, 4294901760
    %v461 = vsub.f32 %v239, %v460
    %v462 = vand.u32 %v461, 4294901760
    %v463 = vsub.f32 %v461, %v462
    %v464 = vand.u32 %v463, 4294901760
    %465 = vmatpush1.msra.mxu0 %v464
    %v466 = vand.u32 %v242, 4294901760
    %v467 = vsub.f32 %v242, %v466
    %v468 = vand.u32 %v467, 4294901760
    %v469 = vsub.f32 %v467, %v468
    %v470 = vand.u32 %v469, 4294901760
    %471 = vmatprep.subr.mxu0 %v470
    %v472 = vand.u32 %v241, 4294901760
    %v473 = vsub.f32 %v241, %v472
    %v474 = vand.u32 %v473, 4294901760
    %v475 = vsub.f32 %v473, %v474
    %v476 = vand.u32 %v475, 4294901760
    %477 = vmatpush1.msra.mxu0 %v476
    %v478 = vand.u32 %v244, 4294901760
    %v479 = vsub.f32 %v244, %v478
    %v480 = vand.u32 %v479, 4294901760
    %v481 = vsub.f32 %v479, %v480
    %v482 = vand.u32 %v481, 4294901760
    %483 = vmatprep.subr.mxu0 %v482
    %v484 = vand.u32 %v243, 4294901760
    %v485 = vsub.f32 %v243, %v484
    %v486 = vand.u32 %v485, 4294901760
    %v487 = vsub.f32 %v485, %v486
    %v488 = vand.u32 %v487, 4294901760
    %489 = vmatpush1.msra.mxu0 %v488
    %v490 = vand.u32 %v246, 4294901760
    %v491 = vsub.f32 %v246, %v490
    %v492 = vand.u32 %v491, 4294901760
    %v493 = vsub.f32 %v491, %v492
    %v494 = vand.u32 %v493, 4294901760
    %495 = vmatprep.subr.mxu0 %v494
    %v496 = vand.u32 %v245, 4294901760
    %v497 = vsub.f32 %v245, %v496
    %v498 = vand.u32 %v497, 4294901760
    %v499 = vsub.f32 %v497, %v498
    %v500 = vand.u32 %v499, 4294901760
    %501 = vmatpush1.msra.mxu0 %v500
    %v502 = vand.u32 %v248, 4294901760
    %v503 = vsub.f32 %v248, %v502
    %v504 = vand.u32 %v503, 4294901760
    %v505 = vsub.f32 %v503, %v504
    %v506 = vand.u32 %v505, 4294901760
    %507 = vmatprep.subr.mxu0 %v506
    %v508 = vand.u32 %v247, 4294901760
    %v509 = vsub.f32 %v247, %v508
    %v510 = vand.u32 %v509, 4294901760
    %v511 = vsub.f32 %v509, %v510
    %v512 = vand.u32 %v511, 4294901760
    %513 = vmatpush1.msra.mxu0 %v512
    %v514 = vand.u32 %v250, 4294901760
    %v515 = vsub.f32 %v250, %v514
    %v516 = vand.u32 %v515, 4294901760
    %v517 = vsub.f32 %v515, %v516
    %v518 = vand.u32 %v517, 4294901760
    %519 = vmatprep.subr.mxu0 %v518
    %v520 = vand.u32 %v249, 4294901760
    %v521 = vsub.f32 %v249, %v520
    %v522 = vand.u32 %v521, 4294901760
    %v523 = vsub.f32 %v521, %v522
    %v524 = vand.u32 %v523, 4294901760
    %525 = vmatpush1.msra.mxu0 %v524
    %v526 = vand.u32 %v252, 4294901760
    %v527 = vsub.f32 %v252, %v526
    %v528 = vand.u32 %v527, 4294901760
    %v529 = vsub.f32 %v527, %v528
    %v530 = vand.u32 %v529, 4294901760
    %531 = vmatprep.subr.mxu0 %v530
    %v532 = vand.u32 %v251, 4294901760
    %v533 = vsub.f32 %v251, %v532
    %v534 = vand.u32 %v533, 4294901760
    %v535 = vsub.f32 %v533, %v534
    %v536 = vand.u32 %v535, 4294901760
    %537 = vmatpush1.msra.mxu0 %v536
    %v538 = vand.u32 %v254, 4294901760
    %v539 = vsub.f32 %v254, %v538
    %v540 = vand.u32 %v539, 4294901760
    %v541 = vsub.f32 %v539, %v540
    %v542 = vand.u32 %v541, 4294901760
    %543 = vmatprep.subr.mxu0 %v542
    %v544 = vand.u32 %v253, 4294901760
    %v545 = vsub.f32 %v253, %v544
    %v546 = vand.u32 %v545, 4294901760
    %v547 = vsub.f32 %v545, %v546
    %v548 = vand.u32 %v547, 4294901760
    %549 = vmatpush1.msra.mxu0 %v548
    %v550 = vand.u32 %v256, 4294901760
    %v551 = vsub.f32 %v256, %v550
    %v552 = vand.u32 %v551, 4294901760
    %v553 = vsub.f32 %v551, %v552
    %v554 = vand.u32 %v553, 4294901760
    %555 = vmatprep.subr.mxu0 %v554
    %v556 = vand.u32 %v255, 4294901760
    %v557 = vsub.f32 %v255, %v556
    %v558 = vand.u32 %v557, 4294901760
    %v559 = vsub.f32 %v557, %v558
    %v560 = vand.u32 %v559, 4294901760
    %561 = vmatpush1.msra.mxu0 %v560
    %v562 = vand.u32 %v258, 4294901760
    %v563 = vsub.f32 %v258, %v562
    %v564 = vand.u32 %v563, 4294901760
    %v565 = vsub.f32 %v563, %v564
    %v566 = vand.u32 %v565, 4294901760
    %567 = vmatprep.subr.mxu0 %v566
    %v568 = vand.u32 %v257, 4294901760
    %v569 = vsub.f32 %v257, %v568
    %v570 = vand.u32 %v569, 4294901760
    %v571 = vsub.f32 %v569, %v570
    %v572 = vand.u32 %v571, 4294901760
    %573 = vmatpush1.msra.mxu0 %v572
    %v574 = vand.u32 %v260, 4294901760
    %v575 = vsub.f32 %v260, %v574
    %v576 = vand.u32 %v575, 4294901760
    %v577 = vsub.f32 %v575, %v576
    %v578 = vand.u32 %v577, 4294901760
    %579 = vmatprep.subr.mxu0 %v578
    %v580 = vand.u32 %v259, 4294901760
    %v581 = vsub.f32 %v259, %v580
    %v582 = vand.u32 %v581, 4294901760
    %v583 = vsub.f32 %v581, %v582
    %v584 = vand.u32 %v583, 4294901760
    %585 = vmatpush1.msra.mxu0 %v584
    %v586 = vand.u32 %v262, 4294901760
    %v587 = vsub.f32 %v262, %v586
    %v588 = vand.u32 %v587, 4294901760
    %v589 = vsub.f32 %v587, %v588
    %v590 = vand.u32 %v589, 4294901760
    %591 = vmatprep.subr.mxu0 %v590
    %v592 = vand.u32 %v261, 4294901760
    %v593 = vsub.f32 %v261, %v592
    %v594 = vand.u32 %v593, 4294901760
    %v595 = vsub.f32 %v593, %v594
    %v596 = vand.u32 %v595, 4294901760
    %597 = vmatpush1.msra.mxu0 %v596
    %v598 = vand.u32 %v264, 4294901760
    %v599 = vsub.f32 %v264, %v598
    %v600 = vand.u32 %v599, 4294901760
    %v601 = vsub.f32 %v599, %v600
    %v602 = vand.u32 %v601, 4294901760
    %603 = vmatprep.subr.mxu0 %v602
    %v604 = vand.u32 %v263, 4294901760
    %v605 = vsub.f32 %v263, %v604
    %v606 = vand.u32 %v605, 4294901760
    %v607 = vsub.f32 %v605, %v606
    %v608 = vand.u32 %v607, 4294901760
    %609 = vmatpush1.msra.mxu0 %v608
    %610 = vmatprep.subr.mxu0 0.0
    %611 = vmatpush1.msra.mxu0 0.0
    %612 = vmatprep.subr.mxu0 0.0
    %613 = vmatpush1.msra.mxu0 0.0
    %614 = vmatprep.subr.mxu0 0.0
    %615 = vmatpush1.msra.mxu0 0.0
    %616 = vmatprep.subr.mxu0 0.0
    %617 = vmatpush1.msra.mxu0 0.0
    %618 = vmatprep.subr.mxu0 0.0
    %619 = vmatpush1.msra.mxu0 0.0
    %620 = vmatprep.subr.mxu0 0.0
    %621 = vmatpush1.msra.mxu0 0.0
    %622 = vmatprep.subr.mxu0 0.0
    %623 = vmatpush1.msra.mxu0 0.0
    %624 = vmatprep.subr.mxu0 0.0
    %625 = vmatpush1.msra.mxu0 0.0
    %626 = vmatprep.subr.mxu0 0.0
    %627 = vmatpush1.msra.mxu0 0.0
    %628 = vmatprep.subr.mxu0 0.0
    %629 = vmatpush1.msra.mxu0 0.0
    %630 = vmatprep.subr.mxu0 0.0
    %631 = vmatpush1.msra.mxu0 0.0
    %632 = vmatprep.subr.mxu0 0.0
    %633 = vmatpush1.msra.mxu0 0.0
    %634 = vmatprep.subr.mxu0 0.0
    %635 = vmatpush1.msra.mxu0 0.0
    %636 = vmatprep.subr.mxu0 0.0
    %637 = vmatpush1.msra.mxu0 0.0
    %638 = vmatprep.subr.mxu0 0.0
    %639 = vmatpush1.msra.mxu0 0.0
    %640 = vmatprep.subr.mxu0 0.0
    %641 = vmatpush1.msra.mxu0 0.0
    %642 = vmatprep.mubr.f32.mxu0 0.0
    %v643 = vand.u32 %v120, 4294901760
    %644 = vmatmul.mubr.f32.gmra.mrb[0].mxu0 %v643
    %v645 = vpop.f32.mrb[0].mxu0
    %v646 = vadd.f32 %v381, %v645
    %v647 = vpop.f32.mrb[0].mxu0
    %v648 = vadd.f32 %v383, %v647
    %649 = vmatprep.mubr.f32.mxu0 0.0
    %v650 = vand.u32 %v121, 4294901760
    %651 = vmatmul.mubr.f32.gmra.mrb[0].mxu0 %v650
    %v652 = vpop.f32.mrb[0].mxu0
    %v653 = vadd.f32 %v392, %v652
    %v654 = vpop.f32.mrb[0].mxu0
    %v655 = vadd.f32 %v394, %v654
    %656 = vmatprep.mubr.f32.mxu0 0.0
    %v657 = vand.u32 %v122, 4294901760
    %658 = vmatmul.mubr.f32.gmra.mrb[0].mxu0 %v657
    %v659 = vpop.f32.mrb[0].mxu0
    %v660 = vadd.f32 %v403, %v659
    %v661 = vpop.f32.mrb[0].mxu0
    %v662 = vadd.f32 %v405, %v661
    %663 = vmatprep.mubr.f32.mxu0 0.0
    %v664 = vand.u32 %v123, 4294901760
    %665 = vmatmul.mubr.f32.gmra.mrb[0].mxu0 %v664
    %v666 = vpop.f32.mrb[0].mxu0
    %v667 = vadd.f32 %v414, %v666
    %v668 = vpop.f32.mrb[0].mxu0
    %v669 = vadd.f32 %v416, %v668
    %670 = vdwg.mxu0
    %v671 = vand.u32 %v234, 4294901760
    %v672 = vsub.f32 %v234, %v671
    %673 = vmatprep.subr.mxu0 %v672
    %v674 = vand.u32 %v233, 4294901760
    %v675 = vsub.f32 %v233, %v674
    %676 = vmatpush1.msra.mxu0 %v675
    %v677 = vand.u32 %v236, 4294901760
    %v678 = vsub.f32 %v236, %v677
    %679 = vmatprep.subr.mxu0 %v678
    %v680 = vand.u32 %v235, 4294901760
    %v681 = vsub.f32 %v235, %v680
    %682 = vmatpush1.msra.mxu0 %v681
    %v683 = vand.u32 %v238, 4294901760
    %v684 = vsub.f32 %v238, %v683
    %685 = vmatprep.subr.mxu0 %v684
    %v686 = vand.u32 %v237, 4294901760
    %v687 = vsub.f32 %v237, %v686
    %688 = vmatpush1.msra.mxu0 %v687
    %v689 = vand.u32 %v240, 4294901760
    %v690 = vsub.f32 %v240, %v689
    %691 = vmatprep.subr.mxu0 %v690
    %v692 = vand.u32 %v239, 4294901760
    %v693 = vsub.f32 %v239, %v692
    %694 = vmatpush1.msra.mxu0 %v693
    %v695 = vand.u32 %v242, 4294901760
    %v696 = vsub.f32 %v242, %v695
    %697 = vmatprep.subr.mxu0 %v696
    %v698 = vand.u32 %v241, 4294901760
    %v699 = vsub.f32 %v241, %v698
    %700 = vmatpush1.msra.mxu0 %v699
    %v701 = vand.u32 %v244, 4294901760
    %v702 = vsub.f32 %v244, %v701
    %703 = vmatprep.subr.mxu0 %v702
    %v704 = vand.u32 %v243, 4294901760
    %v705 = vsub.f32 %v243, %v704
    %706 = vmatpush1.msra.mxu0 %v705
    %v707 = vand.u32 %v246, 4294901760
    %v708 = vsub.f32 %v246, %v707
    %709 = vmatprep.subr.mxu0 %v708
    %v710 = vand.u32 %v245, 4294901760
    %v711 = vsub.f32 %v245, %v710
    %712 = vmatpush1.msra.mxu0 %v711
    %v713 = vand.u32 %v248, 4294901760
    %v714 = vsub.f32 %v248, %v713
    %715 = vmatprep.subr.mxu0 %v714
    %v716 = vand.u32 %v247, 4294901760
    %v717 = vsub.f32 %v247, %v716
    %718 = vmatpush1.msra.mxu0 %v717
    %v719 = vand.u32 %v250, 4294901760
    %v720 = vsub.f32 %v250, %v719
    %721 = vmatprep.subr.mxu0 %v720
    %v722 = vand.u32 %v249, 4294901760
    %v723 = vsub.f32 %v249, %v722
    %724 = vmatpush1.msra.mxu0 %v723
    %v725 = vand.u32 %v252, 4294901760
    %v726 = vsub.f32 %v252, %v725
    %727 = vmatprep.subr.mxu0 %v726
    %v728 = vand.u32 %v251, 4294901760
    %v729 = vsub.f32 %v251, %v728
    %730 = vmatpush1.msra.mxu0 %v729
    %v731 = vand.u32 %v254, 4294901760
    %v732 = vsub.f32 %v254, %v731
    %733 = vmatprep.subr.mxu0 %v732
    %v734 = vand.u32 %v253, 4294901760
    %v735 = vsub.f32 %v253, %v734
    %736 = vmatpush1.msra.mxu0 %v735
    %v737 = vand.u32 %v256, 4294901760
    %v738 = vsub.f32 %v256, %v737
    %739 = vmatprep.subr.mxu0 %v738
    %v740 = vand.u32 %v255, 4294901760
    %v741 = vsub.f32 %v255, %v740
    %742 = vmatpush1.msra.mxu0 %v741
    %v743 = vand.u32 %v258, 4294901760
    %v744 = vsub.f32 %v258, %v743
    %745 = vmatprep.subr.mxu0 %v744
    %v746 = vand.u32 %v257, 4294901760
    %v747 = vsub.f32 %v257, %v746
    %748 = vmatpush1.msra.mxu0 %v747
    %v749 = vand.u32 %v260, 4294901760
    %v750 = vsub.f32 %v260, %v749
    %751 = vmatprep.subr.mxu0 %v750
    %v752 = vand.u32 %v259, 4294901760
    %v753 = vsub.f32 %v259, %v752
    %754 = vmatpush1.msra.mxu0 %v753
    %v755 = vand.u32 %v262, 4294901760
    %v756 = vsub.f32 %v262, %v755
    %757 = vmatprep.subr.mxu0 %v756
    %v758 = vand.u32 %v261, 4294901760
    %v759 = vsub.f32 %v261, %v758
    %760 = vmatpush1.msra.mxu0 %v759
    %v761 = vand.u32 %v264, 4294901760
    %v762 = vsub.f32 %v264, %v761
    %763 = vmatprep.subr.mxu0 %v762
    %v764 = vand.u32 %v263, 4294901760
    %v765 = vsub.f32 %v263, %v764
    %766 = vmatpush1.msra.mxu0 %v765
    %767 = vmatprep.subr.mxu0 0.0
    %768 = vmatpush1.msra.mxu0 0.0
    %769 = vmatprep.subr.mxu0 0.0
    %770 = vmatpush1.msra.mxu0 0.0
    %771 = vmatprep.subr.mxu0 0.0
    %772 = vmatpush1.msra.mxu0 0.0
    %773 = vmatprep.subr.mxu0 0.0
    %774 = vmatpush1.msra.mxu0 0.0
    %775 = vmatprep.subr.mxu0 0.0
    %776 = vmatpush1.msra.mxu0 0.0
    %777 = vmatprep.subr.mxu0 0.0
    %778 = vmatpush1.msra.mxu0 0.0
    %779 = vmatprep.subr.mxu0 0.0
    %780 = vmatpush1.msra.mxu0 0.0
    %781 = vmatprep.subr.mxu0 0.0
    %782 = vmatpush1.msra.mxu0 0.0
    %783 = vmatprep.subr.mxu0 0.0
    %784 = vmatpush1.msra.mxu0 0.0
    %785 = vmatprep.subr.mxu0 0.0
    %786 = vmatpush1.msra.mxu0 0.0
    %787 = vmatprep.subr.mxu0 0.0
    %788 = vmatpush1.msra.mxu0 0.0
    %789 = vmatprep.subr.mxu0 0.0
    %790 = vmatpush1.msra.mxu0 0.0
    %791 = vmatprep.subr.mxu0 0.0
    %792 = vmatpush1.msra.mxu0 0.0
    %793 = vmatprep.subr.mxu0 0.0
    %794 = vmatpush1.msra.mxu0 0.0
    %795 = vmatprep.subr.mxu0 0.0
    %796 = vmatpush1.msra.mxu0 0.0
    %797 = vmatprep.subr.mxu0 0.0
    %798 = vmatpush1.msra.mxu0 0.0
    %799 = vmatprep.mubr.f32.mxu0 0.0
    %v800 = vand.u32 %v120, 4294901760
    %v801 = vsub.f32 %v120, %v800
    %802 = vmatmul.mubr.f32.gmra.mrb[0].mxu0 %v801
    %v803 = vpop.f32.mrb[0].mxu0
    %v804 = vadd.f32 %v646, %v803
    %v805 = vpop.f32.mrb[0].mxu0
    %v806 = vadd.f32 %v648, %v805
    %807 = vmatprep.mubr.f32.mxu0 0.0
    %v808 = vand.u32 %v121, 4294901760
    %v809 = vsub.f32 %v121, %v808
    %810 = vmatmul.mubr.f32.gmra.mrb[0].mxu0 %v809
    %v811 = vpop.f32.mrb[0].mxu0
    %v812 = vadd.f32 %v653, %v811
    %v813 = vpop.f32.mrb[0].mxu0
    %v814 = vadd.f32 %v655, %v813
    %815 = vmatprep.mubr.f32.mxu0 0.0
    %v816 = vand.u32 %v122, 4294901760
    %v817 = vsub.f32 %v122, %v816
    %818 = vmatmul.mubr.f32.gmra.mrb[0].mxu0 %v817
    %v819 = vpop.f32.mrb[0].mxu0
    %v820 = vadd.f32 %v660, %v819
    %v821 = vpop.f32.mrb[0].mxu0
    %v822 = vadd.f32 %v662, %v821
    %823 = vmatprep.mubr.f32.mxu0 0.0
    %v824 = vand.u32 %v123, 4294901760
    %v825 = vsub.f32 %v123, %v824
    %826 = vmatmul.mubr.f32.gmra.mrb[0].mxu0 %v825
    %v827 = vpop.f32.mrb[0].mxu0
    %v828 = vadd.f32 %v667, %v827
    %v829 = vpop.f32.mrb[0].mxu0
    %v830 = vadd.f32 %v669, %v829
    %831 = vdwg.mxu0
    %v832 = vand.u32 %v234, 4294901760
    %833 = vmatprep.subr.mxu0 %v832
    %v834 = vand.u32 %v233, 4294901760
    %835 = vmatpush1.msra.mxu0 %v834
    %v836 = vand.u32 %v236, 4294901760
    %837 = vmatprep.subr.mxu0 %v836
    %v838 = vand.u32 %v235, 4294901760
    %839 = vmatpush1.msra.mxu0 %v838
    %v840 = vand.u32 %v238, 4294901760
    %841 = vmatprep.subr.mxu0 %v840
    %v842 = vand.u32 %v237, 4294901760
    %843 = vmatpush1.msra.mxu0 %v842
    %v844 = vand.u32 %v240, 4294901760
    %845 = vmatprep.subr.mxu0 %v844
    %v846 = vand.u32 %v239, 4294901760
    %847 = vmatpush1.msra.mxu0 %v846
    %v848 = vand.u32 %v242, 4294901760
    %849 = vmatprep.subr.mxu0 %v848
    %v850 = vand.u32 %v241, 4294901760
    %851 = vmatpush1.msra.mxu0 %v850
    %v852 = vand.u32 %v244, 4294901760
    %853 = vmatprep.subr.mxu0 %v852
    %v854 = vand.u32 %v243, 4294901760
    %855 = vmatpush1.msra.mxu0 %v854
    %v856 = vand.u32 %v246, 4294901760
    %857 = vmatprep.subr.mxu0 %v856
    %v858 = vand.u32 %v245, 4294901760
    %859 = vmatpush1.msra.mxu0 %v858
    %v860 = vand.u32 %v248, 4294901760
    %861 = vmatprep.subr.mxu0 %v860
    %v862 = vand.u32 %v247, 4294901760
    %863 = vmatpush1.msra.mxu0 %v862
    %v864 = vand.u32 %v250, 4294901760
    %865 = vmatprep.subr.mxu0 %v864
    %v866 = vand.u32 %v249, 4294901760
    %867 = vmatpush1.msra.mxu0 %v866
    %v868 = vand.u32 %v252, 4294901760
    %869 = vmatprep.subr.mxu0 %v868
    %v870 = vand.u32 %v251, 4294901760
    %871 = vmatpush1.msra.mxu0 %v870
    %v872 = vand.u32 %v254, 4294901760
    %873 = vmatprep.subr.mxu0 %v872
    %v874 = vand.u32 %v253, 4294901760
    %875 = vmatpush1.msra.mxu0 %v874
    %v876 = vand.u32 %v256, 4294901760
    %877 = vmatprep.subr.mxu0 %v876
    %v878 = vand.u32 %v255, 4294901760
    %879 = vmatpush1.msra.mxu0 %v878
    %v880 = vand.u32 %v258, 4294901760
    %881 = vmatprep.subr.mxu0 %v880
    %v882 = vand.u32 %v257, 4294901760
    %883 = vmatpush1.msra.mxu0 %v882
    %v884 = vand.u32 %v260, 4294901760
    %885 = vmatprep.subr.mxu0 %v884
    %v886 = vand.u32 %v259, 4294901760
    %887 = vmatpush1.msra.mxu0 %v886
    %v888 = vand.u32 %v262, 4294901760
    %889 = vmatprep.subr.mxu0 %v888
    %v890 = vand.u32 %v261, 4294901760
    %891 = vmatpush1.msra.mxu0 %v890
    %v892 = vand.u32 %v264, 4294901760
    %893 = vmatprep.subr.mxu0 %v892
    %v894 = vand.u32 %v263, 4294901760
    %895 = vmatpush1.msra.mxu0 %v894
    %896 = vmatprep.subr.mxu0 0.0
    %897 = vmatpush1.msra.mxu0 0.0
    %898 = vmatprep.subr.mxu0 0.0
    %899 = vmatpush1.msra.mxu0 0.0
    %900 = vmatprep.subr.mxu0 0.0
    %901 = vmatpush1.msra.mxu0 0.0
    %902 = vmatprep.subr.mxu0 0.0
    %903 = vmatpush1.msra.mxu0 0.0
    %904 = vmatprep.subr.mxu0 0.0
    %905 = vmatpush1.msra.mxu0 0.0
    %906 = vmatprep.subr.mxu0 0.0
    %907 = vmatpush1.msra.mxu0 0.0
    %908 = vmatprep.subr.mxu0 0.0
    %909 = vmatpush1.msra.mxu0 0.0
    %910 = vmatprep.subr.mxu0 0.0
    %911 = vmatpush1.msra.mxu0 0.0
    %912 = vmatprep.subr.mxu0 0.0
    %913 = vmatpush1.msra.mxu0 0.0
    %914 = vmatprep.subr.mxu0 0.0
    %915 = vmatpush1.msra.mxu0 0.0
    %916 = vmatprep.subr.mxu0 0.0
    %917 = vmatpush1.msra.mxu0 0.0
    %918 = vmatprep.subr.mxu0 0.0
    %919 = vmatpush1.msra.mxu0 0.0
    %920 = vmatprep.subr.mxu0 0.0
    %921 = vmatpush1.msra.mxu0 0.0
    %922 = vmatprep.subr.mxu0 0.0
    %923 = vmatpush1.msra.mxu0 0.0
    %924 = vmatprep.subr.mxu0 0.0
    %925 = vmatpush1.msra.mxu0 0.0
    %926 = vmatprep.subr.mxu0 0.0
    %927 = vmatpush1.msra.mxu0 0.0
    %928 = vmatprep.mubr.f32.mxu0 0.0
    %v929 = vand.u32 %v120, 4294901760
    %v930 = vsub.f32 %v120, %v929
    %v931 = vand.u32 %v930, 4294901760
    %932 = vmatmul.mubr.f32.gmra.mrb[0].mxu0 %v931
    %v933 = vpop.f32.mrb[0].mxu0
    %v934 = vadd.f32 %v804, %v933
    %v935 = vpop.f32.mrb[0].mxu0
    %v936 = vadd.f32 %v806, %v935
    %937 = vmatprep.mubr.f32.mxu0 0.0
    %v938 = vand.u32 %v121, 4294901760
    %v939 = vsub.f32 %v121, %v938
    %v940 = vand.u32 %v939, 4294901760
    %941 = vmatmul.mubr.f32.gmra.mrb[0].mxu0 %v940
    %v942 = vpop.f32.mrb[0].mxu0
    %v943 = vadd.f32 %v812, %v942
    %v944 = vpop.f32.mrb[0].mxu0
    %v945 = vadd.f32 %v814, %v944
    %946 = vmatprep.mubr.f32.mxu0 0.0
    %v947 = vand.u32 %v122, 4294901760
    %v948 = vsub.f32 %v122, %v947
    %v949 = vand.u32 %v948, 4294901760
    %950 = vmatmul.mubr.f32.gmra.mrb[0].mxu0 %v949
    %v951 = vpop.f32.mrb[0].mxu0
    %v952 = vadd.f32 %v820, %v951
    %v953 = vpop.f32.mrb[0].mxu0
    %v954 = vadd.f32 %v822, %v953
    %955 = vmatprep.mubr.f32.mxu0 0.0
    %v956 = vand.u32 %v123, 4294901760
    %v957 = vsub.f32 %v123, %v956
    %v958 = vand.u32 %v957, 4294901760
    %959 = vmatmul.mubr.f32.gmra.mrb[0].mxu0 %v958
    %v960 = vpop.f32.mrb[0].mxu0
    %v961 = vadd.f32 %v828, %v960
    %v962 = vpop.f32.mrb[0].mxu0
    %v963 = vadd.f32 %v830, %v962
    %964 = vdwg.mxu0
    %v965 = vand.u32 %v234, 4294901760
    %v966 = vsub.f32 %v234, %v965
    %v967 = vand.u32 %v966, 4294901760
    %968 = vmatprep.subr.mxu0 %v967
    %v969 = vand.u32 %v233, 4294901760
    %v970 = vsub.f32 %v233, %v969
    %v971 = vand.u32 %v970, 4294901760
    %972 = vmatpush1.msra.mxu0 %v971
    %v973 = vand.u32 %v236, 4294901760
    %v974 = vsub.f32 %v236, %v973
    %v975 = vand.u32 %v974, 4294901760
    %976 = vmatprep.subr.mxu0 %v975
    %v977 = vand.u32 %v235, 4294901760
    %v978 = vsub.f32 %v235, %v977
    %v979 = vand.u32 %v978, 4294901760
    %980 = vmatpush1.msra.mxu0 %v979
    %v981 = vand.u32 %v238, 4294901760
    %v982 = vsub.f32 %v238, %v981
    %v983 = vand.u32 %v982, 4294901760
    %984 = vmatprep.subr.mxu0 %v983
    %v985 = vand.u32 %v237, 4294901760
    %v986 = vsub.f32 %v237, %v985
    %v987 = vand.u32 %v986, 4294901760
    %988 = vmatpush1.msra.mxu0 %v987
    %v989 = vand.u32 %v240, 4294901760
    %v990 = vsub.f32 %v240, %v989
    %v991 = vand.u32 %v990, 4294901760
    %992 = vmatprep.subr.mxu0 %v991
    %v993 = vand.u32 %v239, 4294901760
    %v994 = vsub.f32 %v239, %v993
    %v995 = vand.u32 %v994, 4294901760
    %996 = vmatpush1.msra.mxu0 %v995
    %v997 = vand.u32 %v242, 4294901760
    %v998 = vsub.f32 %v242, %v997
    %v999 = vand.u32 %v998, 4294901760
    %1000 = vmatprep.subr.mxu0 %v999
    %v1001 = vand.u32 %v241, 4294901760
    %v1002 = vsub.f32 %v241, %v1001
    %v1003 = vand.u32 %v1002, 4294901760
    %1004 = vmatpush1.msra.mxu0 %v1003
    %v1005 = vand.u32 %v244, 4294901760
    %v1006 = vsub.f32 %v244, %v1005
    %v1007 = vand.u32 %v1006, 4294901760
    %1008 = vmatprep.subr.mxu0 %v1007
    %v1009 = vand.u32 %v243, 4294901760
    %v1010 = vsub.f32 %v243, %v1009
    %v1011 = vand.u32 %v1010, 4294901760
    %1012 = vmatpush1.msra.mxu0 %v1011
    %v1013 = vand.u32 %v246, 4294901760
    %v1014 = vsub.f32 %v246, %v1013
    %v1015 = vand.u32 %v1014, 4294901760
    %1016 = vmatprep.subr.mxu0 %v1015
    %v1017 = vand.u32 %v245, 4294901760
    %v1018 = vsub.f32 %v245, %v1017
    %v1019 = vand.u32 %v1018, 4294901760
    %1020 = vmatpush1.msra.mxu0 %v1019
    %v1021 = vand.u32 %v248, 4294901760
    %v1022 = vsub.f32 %v248, %v1021
    %v1023 = vand.u32 %v1022, 4294901760
    %1024 = vmatprep.subr.mxu0 %v1023
    %v1025 = vand.u32 %v247, 4294901760
    %v1026 = vsub.f32 %v247, %v1025
    %v1027 = vand.u32 %v1026, 4294901760
    %1028 = vmatpush1.msra.mxu0 %v1027
    %v1029 = vand.u32 %v250, 4294901760
    %v1030 = vsub.f32 %v250, %v1029
    %v1031 = vand.u32 %v1030, 4294901760
    %1032 = vmatprep.subr.mxu0 %v1031
    %v1033 = vand.u32 %v249, 4294901760
    %v1034 = vsub.f32 %v249, %v1033
    %v1035 = vand.u32 %v1034, 4294901760
    %1036 = vmatpush1.msra.mxu0 %v1035
    %v1037 = vand.u32 %v252, 4294901760
    %v1038 = vsub.f32 %v252, %v1037
    %v1039 = vand.u32 %v1038, 4294901760
    %1040 = vmatprep.subr.mxu0 %v1039
    %v1041 = vand.u32 %v251, 4294901760
    %v1042 = vsub.f32 %v251, %v1041
    %v1043 = vand.u32 %v1042, 4294901760
    %1044 = vmatpush1.msra.mxu0 %v1043
    %v1045 = vand.u32 %v254, 4294901760
    %v1046 = vsub.f32 %v254, %v1045
    %v1047 = vand.u32 %v1046, 4294901760
    %1048 = vmatprep.subr.mxu0 %v1047
    %v1049 = vand.u32 %v253, 4294901760
    %v1050 = vsub.f32 %v253, %v1049
    %v1051 = vand.u32 %v1050, 4294901760
    %1052 = vmatpush1.msra.mxu0 %v1051
    %v1053 = vand.u32 %v256, 4294901760
    %v1054 = vsub.f32 %v256, %v1053
    %v1055 = vand.u32 %v1054, 4294901760
    %1056 = vmatprep.subr.mxu0 %v1055
    %v1057 = vand.u32 %v255, 4294901760
    %v1058 = vsub.f32 %v255, %v1057
    %v1059 = vand.u32 %v1058, 4294901760
    %1060 = vmatpush1.msra.mxu0 %v1059
    %v1061 = vand.u32 %v258, 4294901760
    %v1062 = vsub.f32 %v258, %v1061
    %v1063 = vand.u32 %v1062, 4294901760
    %1064 = vmatprep.subr.mxu0 %v1063
    %v1065 = vand.u32 %v257, 4294901760
    %v1066 = vsub.f32 %v257, %v1065
    %v1067 = vand.u32 %v1066, 4294901760
    %1068 = vmatpush1.msra.mxu0 %v1067
    %v1069 = vand.u32 %v260, 4294901760
    %v1070 = vsub.f32 %v260, %v1069
    %v1071 = vand.u32 %v1070, 4294901760
    %1072 = vmatprep.subr.mxu0 %v1071
    %v1073 = vand.u32 %v259, 4294901760
    %v1074 = vsub.f32 %v259, %v1073
    %v1075 = vand.u32 %v1074, 4294901760
    %1076 = vmatpush1.msra.mxu0 %v1075
    %v1077 = vand.u32 %v262, 4294901760
    %v1078 = vsub.f32 %v262, %v1077
    %v1079 = vand.u32 %v1078, 4294901760
    %1080 = vmatprep.subr.mxu0 %v1079
    %v1081 = vand.u32 %v261, 4294901760
    %v1082 = vsub.f32 %v261, %v1081
    %v1083 = vand.u32 %v1082, 4294901760
    %1084 = vmatpush1.msra.mxu0 %v1083
    %v1085 = vand.u32 %v264, 4294901760
    %v1086 = vsub.f32 %v264, %v1085
    %v1087 = vand.u32 %v1086, 4294901760
    %1088 = vmatprep.subr.mxu0 %v1087
    %v1089 = vand.u32 %v263, 4294901760
    %v1090 = vsub.f32 %v263, %v1089
    %v1091 = vand.u32 %v1090, 4294901760
    %1092 = vmatpush1.msra.mxu0 %v1091
    %1093 = vmatprep.subr.mxu0 0.0
    %1094 = vmatpush1.msra.mxu0 0.0
    %1095 = vmatprep.subr.mxu0 0.0
    %1096 = vmatpush1.msra.mxu0 0.0
    %1097 = vmatprep.subr.mxu0 0.0
    %1098 = vmatpush1.msra.mxu0 0.0
    %1099 = vmatprep.subr.mxu0 0.0
    %1100 = vmatpush1.msra.mxu0 0.0
    %1101 = vmatprep.subr.mxu0 0.0
    %1102 = vmatpush1.msra.mxu0 0.0
    %1103 = vmatprep.subr.mxu0 0.0
    %1104 = vmatpush1.msra.mxu0 0.0
    %1105 = vmatprep.subr.mxu0 0.0
    %1106 = vmatpush1.msra.mxu0 0.0
    %1107 = vmatprep.subr.mxu0 0.0
    %1108 = vmatpush1.msra.mxu0 0.0
    %1109 = vmatprep.subr.mxu0 0.0
    %1110 = vmatpush1.msra.mxu0 0.0
    %1111 = vmatprep.subr.mxu0 0.0
    %1112 = vmatpush1.msra.mxu0 0.0
    %1113 = vmatprep.subr.mxu0 0.0
    %1114 = vmatpush1.msra.mxu0 0.0
    %1115 = vmatprep.subr.mxu0 0.0
    %1116 = vmatpush1.msra.mxu0 0.0
    %1117 = vmatprep.subr.mxu0 0.0
    %1118 = vmatpush1.msra.mxu0 0.0
    %1119 = vmatprep.subr.mxu0 0.0
    %1120 = vmatpush1.msra.mxu0 0.0
    %1121 = vmatprep.subr.mxu0 0.0
    %1122 = vmatpush1.msra.mxu0 0.0
    %1123 = vmatprep.subr.mxu0 0.0
    %1124 = vmatpush1.msra.mxu0 0.0
    %1125 = vmatprep.mubr.f32.mxu0 0.0
    %v1126 = vand.u32 %v120, 4294901760
    %1127 = vmatmul.mubr.f32.gmra.mrb[0].mxu0 %v1126
    %v1128 = vpop.f32.mrb[0].mxu0
    %v1129 = vadd.f32 %v934, %v1128
    %v1130 = vpop.f32.mrb[0].mxu0
    %v1131 = vadd.f32 %v936, %v1130
    %1132 = vmatprep.mubr.f32.mxu0 0.0
    %v1133 = vand.u32 %v121, 4294901760
    %1134 = vmatmul.mubr.f32.gmra.mrb[0].mxu0 %v1133
    %v1135 = vpop.f32.mrb[0].mxu0
    %v1136 = vadd.f32 %v943, %v1135
    %v1137 = vpop.f32.mrb[0].mxu0
    %v1138 = vadd.f32 %v945, %v1137
    %1139 = vmatprep.mubr.f32.mxu0 0.0
    %v1140 = vand.u32 %v122, 4294901760
    %1141 = vmatmul.mubr.f32.gmra.mrb[0].mxu0 %v1140
    %v1142 = vpop.f32.mrb[0].mxu0
    %v1143 = vadd.f32 %v952, %v1142
    %v1144 = vpop.f32.mrb[0].mxu0
    %v1145 = vadd.f32 %v954, %v1144
    %1146 = vmatprep.mubr.f32.mxu0 0.0
    %v1147 = vand.u32 %v123, 4294901760
    %1148 = vmatmul.mubr.f32.gmra.mrb[0].mxu0 %v1147
    %v1149 = vpop.f32.mrb[0].mxu0
    %v1150 = vadd.f32 %v961, %v1149
    %v1151 = vpop.f32.mrb[0].mxu0
    %v1152 = vadd.f32 %v963, %v1151
    %1153 = vdwg.mxu0
    %v1154 = vand.u32 %v234, 4294901760
    %1155 = vmatprep.subr.mxu0 %v1154
    %v1156 = vand.u32 %v233, 4294901760
    %1157 = vmatpush1.msra.mxu0 %v1156
    %v1158 = vand.u32 %v236, 4294901760
    %1159 = vmatprep.subr.mxu0 %v1158
    %v1160 = vand.u32 %v235, 4294901760
    %1161 = vmatpush1.msra.mxu0 %v1160
    %v1162 = vand.u32 %v238, 4294901760
    %1163 = vmatprep.subr.mxu0 %v1162
    %v1164 = vand.u32 %v237, 4294901760
    %1165 = vmatpush1.msra.mxu0 %v1164
    %v1166 = vand.u32 %v240, 4294901760
    %1167 = vmatprep.subr.mxu0 %v1166
    %v1168 = vand.u32 %v239, 4294901760
    %1169 = vmatpush1.msra.mxu0 %v1168
    %v1170 = vand.u32 %v242, 4294901760
    %1171 = vmatprep.subr.mxu0 %v1170
    %v1172 = vand.u32 %v241, 4294901760
    %1173 = vmatpush1.msra.mxu0 %v1172
    %v1174 = vand.u32 %v244, 4294901760
    %1175 = vmatprep.subr.mxu0 %v1174
    %v1176 = vand.u32 %v243, 4294901760
    %1177 = vmatpush1.msra.mxu0 %v1176
    %v1178 = vand.u32 %v246, 4294901760
    %1179 = vmatprep.subr.mxu0 %v1178
    %v1180 = vand.u32 %v245, 4294901760
    %1181 = vmatpush1.msra.mxu0 %v1180
    %v1182 = vand.u32 %v248, 4294901760
    %1183 = vmatprep.subr.mxu0 %v1182
    %v1184 = vand.u32 %v247, 4294901760
    %1185 = vmatpush1.msra.mxu0 %v1184
    %v1186 = vand.u32 %v250, 4294901760
    %1187 = vmatprep.subr.mxu0 %v1186
    %v1188 = vand.u32 %v249, 4294901760
    %1189 = vmatpush1.msra.mxu0 %v1188
    %v1190 = vand.u32 %v252, 4294901760
    %1191 = vmatprep.subr.mxu0 %v1190
    %v1192 = vand.u32 %v251, 4294901760
    %1193 = vmatpush1.msra.mxu0 %v1192
    %v1194 = vand.u32 %v254, 4294901760
    %1195 = vmatprep.subr.mxu0 %v1194
    %v1196 = vand.u32 %v253, 4294901760
    %1197 = vmatpush1.msra.mxu0 %v1196
    %v1198 = vand.u32 %v256, 4294901760
    %1199 = vmatprep.subr.mxu0 %v1198
    %v1200 = vand.u32 %v255, 4294901760
    %1201 = vmatpush1.msra.mxu0 %v1200
    %v1202 = vand.u32 %v258, 4294901760
    %1203 = vmatprep.subr.mxu0 %v1202
    %v1204 = vand.u32 %v257, 4294901760
    %1205 = vmatpush1.msra.mxu0 %v1204
    %v1206 = vand.u32 %v260, 4294901760
    %1207 = vmatprep.subr.mxu0 %v1206
    %v1208 = vand.u32 %v259, 4294901760
    %1209 = vmatpush1.msra.mxu0 %v1208
    %v1210 = vand.u32 %v262, 4294901760
    %1211 = vmatprep.subr.mxu0 %v1210
    %v1212 = vand.u32 %v261, 4294901760
    %1213 = vmatpush1.msra.mxu0 %v1212
    %v1214 = vand.u32 %v264, 4294901760
    %1215 = vmatprep.subr.mxu0 %v1214
    %v1216 = vand.u32 %v263, 4294901760
    %1217 = vmatpush1.msra.mxu0 %v1216
    %1218 = vmatprep.subr.mxu0 0.0
    %1219 = vmatpush1.msra.mxu0 0.0
    %1220 = vmatprep.subr.mxu0 0.0
    %1221 = vmatpush1.msra.mxu0 0.0
    %1222 = vmatprep.subr.mxu0 0.0
    %1223 = vmatpush1.msra.mxu0 0.0
    %1224 = vmatprep.subr.mxu0 0.0
    %1225 = vmatpush1.msra.mxu0 0.0
    %1226 = vmatprep.subr.mxu0 0.0
    %1227 = vmatpush1.msra.mxu0 0.0
    %1228 = vmatprep.subr.mxu0 0.0
    %1229 = vmatpush1.msra.mxu0 0.0
    %1230 = vmatprep.subr.mxu0 0.0
    %1231 = vmatpush1.msra.mxu0 0.0
    %1232 = vmatprep.subr.mxu0 0.0
    %1233 = vmatpush1.msra.mxu0 0.0
    %1234 = vmatprep.subr.mxu0 0.0
    %1235 = vmatpush1.msra.mxu0 0.0
    %1236 = vmatprep.subr.mxu0 0.0
    %1237 = vmatpush1.msra.mxu0 0.0
    %1238 = vmatprep.subr.mxu0 0.0
    %1239 = vmatpush1.msra.mxu0 0.0
    %1240 = vmatprep.subr.mxu0 0.0
    %1241 = vmatpush1.msra.mxu0 0.0
    %1242 = vmatprep.subr.mxu0 0.0
    %1243 = vmatpush1.msra.mxu0 0.0
    %1244 = vmatprep.subr.mxu0 0.0
    %1245 = vmatpush1.msra.mxu0 0.0
    %1246 = vmatprep.subr.mxu0 0.0
    %1247 = vmatpush1.msra.mxu0 0.0
    %1248 = vmatprep.subr.mxu0 0.0
    %1249 = vmatpush1.msra.mxu0 0.0
    %1250 = vmatprep.mubr.f32.mxu0 0.0
    %v1251 = vand.u32 %v120, 4294901760
    %1252 = vmatmul.mubr.f32.gmra.mrb[0].mxu0 %v1251
    %v1253 = vpop.f32.mrb[0].mxu0
    %v1254 = vadd.f32 %v1129, %v1253
    %v1255 = vpop.f32.mrb[0].mxu0
    %v1256 = vadd.f32 %v1131, %v1255
    %1257 = vmatprep.mubr.f32.mxu0 0.0
    %v1258 = vand.u32 %v121, 4294901760
    %1259 = vmatmul.mubr.f32.gmra.mrb[0].mxu0 %v1258
    %v1260 = vpop.f32.mrb[0].mxu0
    %v1261 = vadd.f32 %v1136, %v1260
    %v1262 = vpop.f32.mrb[0].mxu0
    %v1263 = vadd.f32 %v1138, %v1262
    %1264 = vmatprep.mubr.f32.mxu0 0.0
    %v1265 = vand.u32 %v122, 4294901760
    %1266 = vmatmul.mubr.f32.gmra.mrb[0].mxu0 %v1265
    %v1267 = vpop.f32.mrb[0].mxu0
    %v1268 = vadd.f32 %v1143, %v1267
    %v1269 = vpop.f32.mrb[0].mxu0
    %v1270 = vadd.f32 %v1145, %v1269
    %1271 = vmatprep.mubr.f32.mxu0 0.0
    %v1272 = vand.u32 %v123, 4294901760
    %1273 = vmatmul.mubr.f32.gmra.mrb[0].mxu0 %v1272
    %v1274 = vpop.f32.mrb[0].mxu0
    %v1275 = vadd.f32 %v1150, %v1274
    %v1276 = vpop.f32.mrb[0].mxu0
    %v1277 = vadd.f32 %v1152, %v1276
    %1278 = vdwg.mxu0
    %v1279 = vmax.f32 %v1254, 0.0
    %v1280 = vmax.f32 %v1256, 0.0
    %v1281 = vmax.f32 %v1261, 0.0
    %v1282 = vmax.f32 %v1263, 0.0
    %v1283 = vmax.f32 %v1268, 0.0
    %v1284 = vmax.f32 %v1270, 0.0
    %v1285 = vmax.f32 %v1275, 0.0
    %v1286 = vmax.f32 %v1277, 0.0
    %v1287 = vld [vmem:[#allocation8] sm:$0xff]
    %v1288 = vld [vmem:[#allocation8 + $0x8] sm:$0xff]
    %v1289 = vld [vmem:[#allocation8 + $0x10] sm:$0xff]
    %v1290 = vld [vmem:[#allocation8 + $0x18] sm:$0xff]
    %v1291 = vld [vmem:[#allocation8 + $0x20] sm:$0xff]
    %v1292 = vld [vmem:[#allocation8 + $0x28] sm:$0xff]
    %v1293 = vld [vmem:[#allocation8 + $0x30] sm:$0xff]
    %v1294 = vld [vmem:[#allocation8 + $0x38] sm:$0xff]
    %v1295 = vld [vmem:[#allocation8 + $0x40] sm:$0xff]
    %v1296 = vld [vmem:[#allocation8 + $0x48] sm:$0xff]
    %v1297 = vld [vmem:[#allocation8 + $0x50] sm:$0xff]
    %v1298 = vld [vmem:[#allocation8 + $0x58] sm:$0xff]
    %v1299 = vld [vmem:[#allocation8 + $0x60] sm:$0xff]
    %v1300 = vld [vmem:[#allocation8 + $0x68] sm:$0xff]
    %v1301 = vld [vmem:[#allocation8 + $0x70] sm:$0xff]
    %v1302 = vld [vmem:[#allocation8 + $0x78] sm:$0xff]
    %v1303 = vld [vmem:[#allocation8 + $0x80] sm:$0xff]
    %v1304 = vld [vmem:[#allocation8 + $0x88] sm:$0xff]
    %v1305 = vld [vmem:[#allocation8 + $0x90] sm:$0xff]
    %v1306 = vld [vmem:[#allocation8 + $0x98] sm:$0xff]
    %v1307 = vld [vmem:[#allocation8 + $0xa0] sm:$0xff]
    %v1308 = vld [vmem:[#allocation8 + $0xa8] sm:$0xff]
    %v1309 = vld [vmem:[#allocation8 + $0xb0] sm:$0xff]
    %v1310 = vld [vmem:[#allocation8 + $0xb8] sm:$0xff]
    %v1311 = vld [vmem:[#allocation8 + $0xc0] sm:$0xff]
    %v1312 = vld [vmem:[#allocation8 + $0xc8] sm:$0xff]
    %v1313 = vld [vmem:[#allocation8 + $0xd0] sm:$0xff]
    %v1314 = vld [vmem:[#allocation8 + $0xd8] sm:$0xff]
    %v1315 = vld [vmem:[#allocation8 + $0xe0] sm:$0xff]
    %v1316 = vld [vmem:[#allocation8 + $0xe8] sm:$0xff]
    %v1317 = vld [vmem:[#allocation8 + $0xf0] sm:$0xff]
    %v1318 = vld [vmem:[#allocation8 + $0xf8] sm:$0xff]
    %v1319 = vld [vmem:[%s5] sm:$0x1]
    %v1321 = vlaneseq
    %v1322 = vshrl.u32 %v1321, 7
    %v1323 = vsub.s32 0, %v1322
    %v1324 = vrot.slane %v1319, %v1323
    %1326 = vmatprep.subr.mxu0 0.0
    %v1327 = vand.u32 %v1287, 4294901760
    %1328 = vmatpush1.msra.mxu0 %v1327
    %1329 = vmatprep.subr.mxu0 0.0
    %v1330 = vand.u32 %v1288, 4294901760
    %1331 = vmatpush1.msra.mxu0 %v1330
    %1332 = vmatprep.subr.mxu0 0.0
    %v1333 = vand.u32 %v1289, 4294901760
    %1334 = vmatpush1.msra.mxu0 %v1333
    %1335 = vmatprep.subr.mxu0 0.0
    %v1336 = vand.u32 %v1290, 4294901760
    %1337 = vmatpush1.msra.mxu0 %v1336
    %1338 = vmatprep.subr.mxu0 0.0
    %v1339 = vand.u32 %v1291, 4294901760
    %1340 = vmatpush1.msra.mxu0 %v1339
    %1341 = vmatprep.subr.mxu0 0.0
    %v1342 = vand.u32 %v1292, 4294901760
    %1343 = vmatpush1.msra.mxu0 %v1342
    %1344 = vmatprep.subr.mxu0 0.0
    %v1345 = vand.u32 %v1293, 4294901760
    %1346 = vmatpush1.msra.mxu0 %v1345
    %1347 = vmatprep.subr.mxu0 0.0
    %v1348 = vand.u32 %v1294, 4294901760
    %1349 = vmatpush1.msra.mxu0 %v1348
    %1350 = vmatprep.subr.mxu0 0.0
    %v1351 = vand.u32 %v1295, 4294901760
    %1352 = vmatpush1.msra.mxu0 %v1351
    %1353 = vmatprep.subr.mxu0 0.0
    %v1354 = vand.u32 %v1296, 4294901760
    %1355 = vmatpush1.msra.mxu0 %v1354
    %1356 = vmatprep.subr.mxu0 0.0
    %v1357 = vand.u32 %v1297, 4294901760
    %1358 = vmatpush1.msra.mxu0 %v1357
    %1359 = vmatprep.subr.mxu0 0.0
    %v1360 = vand.u32 %v1298, 4294901760
    %1361 = vmatpush1.msra.mxu0 %v1360
    %1362 = vmatprep.subr.mxu0 0.0
    %v1363 = vand.u32 %v1299, 4294901760
    %1364 = vmatpush1.msra.mxu0 %v1363
    %1365 = vmatprep.subr.mxu0 0.0
    %v1366 = vand.u32 %v1300, 4294901760
    %1367 = vmatpush1.msra.mxu0 %v1366
    %1368 = vmatprep.subr.mxu0 0.0
    %v1369 = vand.u32 %v1301, 4294901760
    %1370 = vmatpush1.msra.mxu0 %v1369
    %1371 = vmatprep.subr.mxu0 0.0
    %v1372 = vand.u32 %v1302, 4294901760
    %1373 = vmatpush1.msra.mxu0 %v1372
    %1374 = vmatprep.subr.mxu0 0.0
    %v1375 = vand.u32 %v1303, 4294901760
    %1376 = vmatpush1.msra.mxu0 %v1375
    %1377 = vmatprep.subr.mxu0 0.0
    %v1378 = vand.u32 %v1304, 4294901760
    %1379 = vmatpush1.msra.mxu0 %v1378
    %1380 = vmatprep.subr.mxu0 0.0
    %v1381 = vand.u32 %v1305, 4294901760
    %1382 = vmatpush1.msra.mxu0 %v1381
    %1383 = vmatprep.subr.mxu0 0.0
    %v1384 = vand.u32 %v1306, 4294901760
    %1385 = vmatpush1.msra.mxu0 %v1384
    %1386 = vmatprep.subr.mxu0 0.0
    %v1387 = vand.u32 %v1307, 4294901760
    %1388 = vmatpush1.msra.mxu0 %v1387
    %1389 = vmatprep.subr.mxu0 0.0
    %v1390 = vand.u32 %v1308, 4294901760
    %1391 = vmatpush1.msra.mxu0 %v1390
    %1392 = vmatprep.subr.mxu0 0.0
    %v1393 = vand.u32 %v1309, 4294901760
    %1394 = vmatpush1.msra.mxu0 %v1393
    %1395 = vmatprep.subr.mxu0 0.0
    %v1396 = vand.u32 %v1310, 4294901760
    %1397 = vmatpush1.msra.mxu0 %v1396
    %1398 = vmatprep.subr.mxu0 0.0
    %v1399 = vand.u32 %v1311, 4294901760
    %1400 = vmatpush1.msra.mxu0 %v1399
    %1401 = vmatprep.subr.mxu0 0.0
    %v1402 = vand.u32 %v1312, 4294901760
    %1403 = vmatpush1.msra.mxu0 %v1402
    %1404 = vmatprep.subr.mxu0 0.0
    %v1405 = vand.u32 %v1313, 4294901760
    %1406 = vmatpush1.msra.mxu0 %v1405
    %1407 = vmatprep.subr.mxu0 0.0
    %v1408 = vand.u32 %v1314, 4294901760
    %1409 = vmatpush1.msra.mxu0 %v1408
    %1410 = vmatprep.subr.mxu0 0.0
    %v1411 = vand.u32 %v1315, 4294901760
    %1412 = vmatpush1.msra.mxu0 %v1411
    %1413 = vmatprep.subr.mxu0 0.0
    %v1414 = vand.u32 %v1316, 4294901760
    %1415 = vmatpush1.msra.mxu0 %v1414
    %1416 = vmatprep.subr.mxu0 0.0
    %v1417 = vand.u32 %v1317, 4294901760
    %1418 = vmatpush1.msra.mxu0 %v1417
    %1419 = vmatprep.subr.mxu0 0.0
    %v1420 = vand.u32 %v1318, 4294901760
    %1421 = vmatpush1.msra.mxu0 %v1420
    %v1422 = vand.u32 %v1280, 4294901760
    %v1423 = vsub.f32 %v1280, %v1422
    %v1424 = vand.u32 %v1423, 4294901760
    %v1425 = vsub.f32 %v1423, %v1424
    %v1426 = vand.u32 %v1425, 4294901760
    %1427 = vmatprep.mubr.f32.mxu0 %v1426
    %v1428 = vand.u32 %v1279, 4294901760
    %v1429 = vsub.f32 %v1279, %v1428
    %v1430 = vand.u32 %v1429, 4294901760
    %v1431 = vsub.f32 %v1429, %v1430
    %v1432 = vand.u32 %v1431, 4294901760
    %1433 = vmatmul.mubr.f32.gmra.mrb[0].mxu0 %v1432
    %v1434 = vpop.f32.mrb[0].mxu0
    %v1435 = vadd.f32 %v1324, %v1434
    %v1436 = vpop.f32.mrb[0].mxu0
    %v1437 = vand.u32 %v1282, 4294901760
    %v1438 = vsub.f32 %v1282, %v1437
    %v1439 = vand.u32 %v1438, 4294901760
    %v1440 = vsub.f32 %v1438, %v1439
    %v1441 = vand.u32 %v1440, 4294901760
    %1442 = vmatprep.mubr.f32.mxu0 %v1441
    %v1443 = vand.u32 %v1281, 4294901760
    %v1444 = vsub.f32 %v1281, %v1443
    %v1445 = vand.u32 %v1444, 4294901760
    %v1446 = vsub.f32 %v1444, %v1445
    %v1447 = vand.u32 %v1446, 4294901760
    %1448 = vmatmul.mubr.f32.gmra.mrb[0].mxu0 %v1447
    %v1449 = vpop.f32.mrb[0].mxu0
    %v1450 = vadd.f32 %v1324, %v1449
    %v1451 = vpop.f32.mrb[0].mxu0
    %v1452 = vand.u32 %v1284, 4294901760
    %v1453 = vsub.f32 %v1284, %v1452
    %v1454 = vand.u32 %v1453, 4294901760
    %v1455 = vsub.f32 %v1453, %v1454
    %v1456 = vand.u32 %v1455, 4294901760
    %1457 = vmatprep.mubr.f32.mxu0 %v1456
    %v1458 = vand.u32 %v1283, 4294901760
    %v1459 = vsub.f32 %v1283, %v1458
    %v1460 = vand.u32 %v1459, 4294901760
    %v1461 = vsub.f32 %v1459, %v1460
    %v1462 = vand.u32 %v1461, 4294901760
    %1463 = vmatmul.mubr.f32.gmra.mrb[0].mxu0 %v1462
    %v1464 = vpop.f32.mrb[0].mxu0
    %v1465 = vadd.f32 %v1324, %v1464
    %v1466 = vpop.f32.mrb[0].mxu0
    %v1467 = vand.u32 %v1286, 4294901760
    %v1468 = vsub.f32 %v1286, %v1467
    %v1469 = vand.u32 %v1468, 4294901760
    %v1470 = vsub.f32 %v1468, %v1469
    %v1471 = vand.u32 %v1470, 4294901760
    %1472 = vmatprep.mubr.f32.mxu0 %v1471
    %v1473 = vand.u32 %v1285, 4294901760
    %v1474 = vsub.f32 %v1285, %v1473
    %v1475 = vand.u32 %v1474, 4294901760
    %v1476 = vsub.f32 %v1474, %v1475
    %v1477 = vand.u32 %v1476, 4294901760
    %1478 = vmatmul.mubr.f32.gmra.mrb[0].mxu0 %v1477
    %v1479 = vpop.f32.mrb[0].mxu0
    %v1480 = vadd.f32 %v1324, %v1479
    %v1481 = vpop.f32.mrb[0].mxu0
    %1482 = vdwg.mxu0
    %1483 = vmatprep.subr.mxu0 0.0
    %v1484 = vand.u32 %v1287, 4294901760
    %v1485 = vsub.f32 %v1287, %v1484
    %v1486 = vand.u32 %v1485, 4294901760
    %v1487 = vsub.f32 %v1485, %v1486
    %v1488 = vand.u32 %v1487, 4294901760
    %1489 = vmatpush1.msra.mxu0 %v1488
    %1490 = vmatprep.subr.mxu0 0.0
    %v1491 = vand.u32 %v1288, 4294901760
    %v1492 = vsub.f32 %v1288, %v1491
    %v1493 = vand.u32 %v1492, 4294901760
    %v1494 = vsub.f32 %v1492, %v1493
    %v1495 = vand.u32 %v1494, 4294901760
    %1496 = vmatpush1.msra.mxu0 %v1495
    %1497 = vmatprep.subr.mxu0 0.0
    %v1498 = vand.u32 %v1289, 4294901760
    %v1499 = vsub.f32 %v1289, %v1498
    %v1500 = vand.u32 %v1499, 4294901760
    %v1501 = vsub.f32 %v1499, %v1500
    %v1502 = vand.u32 %v1501, 4294901760
    %1503 = vmatpush1.msra.mxu0 %v1502
    %1504 = vmatprep.subr.mxu0 0.0
    %v1505 = vand.u32 %v1290, 4294901760
    %v1506 = vsub.f32 %v1290, %v1505
    %v1507 = vand.u32 %v1506, 4294901760
    %v1508 = vsub.f32 %v1506, %v1507
    %v1509 = vand.u32 %v1508, 4294901760
    %1510 = vmatpush1.msra.mxu0 %v1509
    %1511 = vmatprep.subr.mxu0 0.0
    %v1512 = vand.u32 %v1291, 4294901760
    %v1513 = vsub.f32 %v1291, %v1512
    %v1514 = vand.u32 %v1513, 4294901760
    %v1515 = vsub.f32 %v1513, %v1514
    %v1516 = vand.u32 %v1515, 4294901760
    %1517 = vmatpush1.msra.mxu0 %v1516
    %1518 = vmatprep.subr.mxu0 0.0
    %v1519 = vand.u32 %v1292, 4294901760
    %v1520 = vsub.f32 %v1292, %v1519
    %v1521 = vand.u32 %v1520, 4294901760
    %v1522 = vsub.f32 %v1520, %v1521
    %v1523 = vand.u32 %v1522, 4294901760
    %1524 = vmatpush1.msra.mxu0 %v1523
    %1525 = vmatprep.subr.mxu0 0.0
    %v1526 = vand.u32 %v1293, 4294901760
    %v1527 = vsub.f32 %v1293, %v1526
    %v1528 = vand.u32 %v1527, 4294901760
    %v1529 = vsub.f32 %v1527, %v1528
    %v1530 = vand.u32 %v1529, 4294901760
    %1531 = vmatpush1.msra.mxu0 %v1530
    %1532 = vmatprep.subr.mxu0 0.0
    %v1533 = vand.u32 %v1294, 4294901760
    %v1534 = vsub.f32 %v1294, %v1533
    %v1535 = vand.u32 %v1534, 4294901760
    %v1536 = vsub.f32 %v1534, %v1535
    %v1537 = vand.u32 %v1536, 4294901760
    %1538 = vmatpush1.msra.mxu0 %v1537
    %1539 = vmatprep.subr.mxu0 0.0
    %v1540 = vand.u32 %v1295, 4294901760
    %v1541 = vsub.f32 %v1295, %v1540
    %v1542 = vand.u32 %v1541, 4294901760
    %v1543 = vsub.f32 %v1541, %v1542
    %v1544 = vand.u32 %v1543, 4294901760
    %1545 = vmatpush1.msra.mxu0 %v1544
    %1546 = vmatprep.subr.mxu0 0.0
    %v1547 = vand.u32 %v1296, 4294901760
    %v1548 = vsub.f32 %v1296, %v1547
    %v1549 = vand.u32 %v1548, 4294901760
    %v1550 = vsub.f32 %v1548, %v1549
    %v1551 = vand.u32 %v1550, 4294901760
    %1552 = vmatpush1.msra.mxu0 %v1551
    %1553 = vmatprep.subr.mxu0 0.0
    %v1554 = vand.u32 %v1297, 4294901760
    %v1555 = vsub.f32 %v1297, %v1554
    %v1556 = vand.u32 %v1555, 4294901760
    %v1557 = vsub.f32 %v1555, %v1556
    %v1558 = vand.u32 %v1557, 4294901760
    %1559 = vmatpush1.msra.mxu0 %v1558
    %1560 = vmatprep.subr.mxu0 0.0
    %v1561 = vand.u32 %v1298, 4294901760
    %v1562 = vsub.f32 %v1298, %v1561
    %v1563 = vand.u32 %v1562, 4294901760
    %v1564 = vsub.f32 %v1562, %v1563
    %v1565 = vand.u32 %v1564, 4294901760
    %1566 = vmatpush1.msra.mxu0 %v1565
    %1567 = vmatprep.subr.mxu0 0.0
    %v1568 = vand.u32 %v1299, 4294901760
    %v1569 = vsub.f32 %v1299, %v1568
    %v1570 = vand.u32 %v1569, 4294901760
    %v1571 = vsub.f32 %v1569, %v1570
    %v1572 = vand.u32 %v1571, 4294901760
    %1573 = vmatpush1.msra.mxu0 %v1572
    %1574 = vmatprep.subr.mxu0 0.0
    %v1575 = vand.u32 %v1300, 4294901760
    %v1576 = vsub.f32 %v1300, %v1575
    %v1577 = vand.u32 %v1576, 4294901760
    %v1578 = vsub.f32 %v1576, %v1577
    %v1579 = vand.u32 %v1578, 4294901760
    %1580 = vmatpush1.msra.mxu0 %v1579
    %1581 = vmatprep.subr.mxu0 0.0
    %v1582 = vand.u32 %v1301, 4294901760
    %v1583 = vsub.f32 %v1301, %v1582
    %v1584 = vand.u32 %v1583, 4294901760
    %v1585 = vsub.f32 %v1583, %v1584
    %v1586 = vand.u32 %v1585, 4294901760
    %1587 = vmatpush1.msra.mxu0 %v1586
    %1588 = vmatprep.subr.mxu0 0.0
    %v1589 = vand.u32 %v1302, 4294901760
    %v1590 = vsub.f32 %v1302, %v1589
    %v1591 = vand.u32 %v1590, 4294901760
    %v1592 = vsub.f32 %v1590, %v1591
    %v1593 = vand.u32 %v1592, 4294901760
    %1594 = vmatpush1.msra.mxu0 %v1593
    %1595 = vmatprep.subr.mxu0 0.0
    %v1596 = vand.u32 %v1303, 4294901760
    %v1597 = vsub.f32 %v1303, %v1596
    %v1598 = vand.u32 %v1597, 4294901760
    %v1599 = vsub.f32 %v1597, %v1598
    %v1600 = vand.u32 %v1599, 4294901760
    %1601 = vmatpush1.msra.mxu0 %v1600
    %1602 = vmatprep.subr.mxu0 0.0
    %v1603 = vand.u32 %v1304, 4294901760
    %v1604 = vsub.f32 %v1304, %v1603
    %v1605 = vand.u32 %v1604, 4294901760
    %v1606 = vsub.f32 %v1604, %v1605
    %v1607 = vand.u32 %v1606, 4294901760
    %1608 = vmatpush1.msra.mxu0 %v1607
    %1609 = vmatprep.subr.mxu0 0.0
    %v1610 = vand.u32 %v1305, 4294901760
    %v1611 = vsub.f32 %v1305, %v1610
    %v1612 = vand.u32 %v1611, 4294901760
    %v1613 = vsub.f32 %v1611, %v1612
    %v1614 = vand.u32 %v1613, 4294901760
    %1615 = vmatpush1.msra.mxu0 %v1614
    %1616 = vmatprep.subr.mxu0 0.0
    %v1617 = vand.u32 %v1306, 4294901760
    %v1618 = vsub.f32 %v1306, %v1617
    %v1619 = vand.u32 %v1618, 4294901760
    %v1620 = vsub.f32 %v1618, %v1619
    %v1621 = vand.u32 %v1620, 4294901760
    %1622 = vmatpush1.msra.mxu0 %v1621
    %1623 = vmatprep.subr.mxu0 0.0
    %v1624 = vand.u32 %v1307, 4294901760
    %v1625 = vsub.f32 %v1307, %v1624
    %v1626 = vand.u32 %v1625, 4294901760
    %v1627 = vsub.f32 %v1625, %v1626
    %v1628 = vand.u32 %v1627, 4294901760
    %1629 = vmatpush1.msra.mxu0 %v1628
    %1630 = vmatprep.subr.mxu0 0.0
    %v1631 = vand.u32 %v1308, 4294901760
    %v1632 = vsub.f32 %v1308, %v1631
    %v1633 = vand.u32 %v1632, 4294901760
    %v1634 = vsub.f32 %v1632, %v1633
    %v1635 = vand.u32 %v1634, 4294901760
    %1636 = vmatpush1.msra.mxu0 %v1635
    %1637 = vmatprep.subr.mxu0 0.0
    %v1638 = vand.u32 %v1309, 4294901760
    %v1639 = vsub.f32 %v1309, %v1638
    %v1640 = vand.u32 %v1639, 4294901760
    %v1641 = vsub.f32 %v1639, %v1640
    %v1642 = vand.u32 %v1641, 4294901760
    %1643 = vmatpush1.msra.mxu0 %v1642
    %1644 = vmatprep.subr.mxu0 0.0
    %v1645 = vand.u32 %v1310, 4294901760
    %v1646 = vsub.f32 %v1310, %v1645
    %v1647 = vand.u32 %v1646, 4294901760
    %v1648 = vsub.f32 %v1646, %v1647
    %v1649 = vand.u32 %v1648, 4294901760
    %1650 = vmatpush1.msra.mxu0 %v1649
    %1651 = vmatprep.subr.mxu0 0.0
    %v1652 = vand.u32 %v1311, 4294901760
    %v1653 = vsub.f32 %v1311, %v1652
    %v1654 = vand.u32 %v1653, 4294901760
    %v1655 = vsub.f32 %v1653, %v1654
    %v1656 = vand.u32 %v1655, 4294901760
    %1657 = vmatpush1.msra.mxu0 %v1656
    %1658 = vmatprep.subr.mxu0 0.0
    %v1659 = vand.u32 %v1312, 4294901760
    %v1660 = vsub.f32 %v1312, %v1659
    %v1661 = vand.u32 %v1660, 4294901760
    %v1662 = vsub.f32 %v1660, %v1661
    %v1663 = vand.u32 %v1662, 4294901760
    %1664 = vmatpush1.msra.mxu0 %v1663
    %1665 = vmatprep.subr.mxu0 0.0
    %v1666 = vand.u32 %v1313, 4294901760
    %v1667 = vsub.f32 %v1313, %v1666
    %v1668 = vand.u32 %v1667, 4294901760
    %v1669 = vsub.f32 %v1667, %v1668
    %v1670 = vand.u32 %v1669, 4294901760
    %1671 = vmatpush1.msra.mxu0 %v1670
    %1672 = vmatprep.subr.mxu0 0.0
    %v1673 = vand.u32 %v1314, 4294901760
    %v1674 = vsub.f32 %v1314, %v1673
    %v1675 = vand.u32 %v1674, 4294901760
    %v1676 = vsub.f32 %v1674, %v1675
    %v1677 = vand.u32 %v1676, 4294901760
    %1678 = vmatpush1.msra.mxu0 %v1677
    %1679 = vmatprep.subr.mxu0 0.0
    %v1680 = vand.u32 %v1315, 4294901760
    %v1681 = vsub.f32 %v1315, %v1680
    %v1682 = vand.u32 %v1681, 4294901760
    %v1683 = vsub.f32 %v1681, %v1682
    %v1684 = vand.u32 %v1683, 4294901760
    %1685 = vmatpush1.msra.mxu0 %v1684
    %1686 = vmatprep.subr.mxu0 0.0
    %v1687 = vand.u32 %v1316, 4294901760
    %v1688 = vsub.f32 %v1316, %v1687
    %v1689 = vand.u32 %v1688, 4294901760
    %v1690 = vsub.f32 %v1688, %v1689
    %v1691 = vand.u32 %v1690, 4294901760
    %1692 = vmatpush1.msra.mxu0 %v1691
    %1693 = vmatprep.subr.mxu0 0.0
    %v1694 = vand.u32 %v1317, 4294901760
    %v1695 = vsub.f32 %v1317, %v1694
    %v1696 = vand.u32 %v1695, 4294901760
    %v1697 = vsub.f32 %v1695, %v1696
    %v1698 = vand.u32 %v1697, 4294901760
    %1699 = vmatpush1.msra.mxu0 %v1698
    %1700 = vmatprep.subr.mxu0 0.0
    %v1701 = vand.u32 %v1318, 4294901760
    %v1702 = vsub.f32 %v1318, %v1701
    %v1703 = vand.u32 %v1702, 4294901760
    %v1704 = vsub.f32 %v1702, %v1703
    %v1705 = vand.u32 %v1704, 4294901760
    %1706 = vmatpush1.msra.mxu0 %v1705
    %v1707 = vand.u32 %v1280, 4294901760
    %1708 = vmatprep.mubr.f32.mxu0 %v1707
    %v1709 = vand.u32 %v1279, 4294901760
    %1710 = vmatmul.mubr.f32.gmra.mrb[0].mxu0 %v1709
    %v1711 = vpop.f32.mrb[0].mxu0
    %v1712 = vadd.f32 %v1435, %v1711
    %v1713 = vpop.f32.mrb[0].mxu0
    %v1714 = vand.u32 %v1282, 4294901760
    %1715 = vmatprep.mubr.f32.mxu0 %v1714
    %v1716 = vand.u32 %v1281, 4294901760
    %1717 = vmatmul.mubr.f32.gmra.mrb[0].mxu0 %v1716
    %v1718 = vpop.f32.mrb[0].mxu0
    %v1719 = vadd.f32 %v1450, %v1718
    %v1720 = vpop.f32.mrb[0].mxu0
    %v1721 = vand.u32 %v1284, 4294901760
    %1722 = vmatprep.mubr.f32.mxu0 %v1721
    %v1723 = vand.u32 %v1283, 4294901760
    %1724 = vmatmul.mubr.f32.gmra.mrb[0].mxu0 %v1723
    %v1725 = vpop.f32.mrb[0].mxu0
    %v1726 = vadd.f32 %v1465, %v1725
    %v1727 = vpop.f32.mrb[0].mxu0
    %v1728 = vand.u32 %v1286, 4294901760
    %1729 = vmatprep.mubr.f32.mxu0 %v1728
    %v1730 = vand.u32 %v1285, 4294901760
    %1731 = vmatmul.mubr.f32.gmra.mrb[0].mxu0 %v1730
    %v1732 = vpop.f32.mrb[0].mxu0
    %v1733 = vadd.f32 %v1480, %v1732
    %v1734 = vpop.f32.mrb[0].mxu0
    %1735 = vdwg.mxu0
    %1736 = vmatprep.subr.mxu0 0.0
    %v1737 = vand.u32 %v1287, 4294901760
    %v1738 = vsub.f32 %v1287, %v1737
    %1739 = vmatpush1.msra.mxu0 %v1738
    %1740 = vmatprep.subr.mxu0 0.0
    %v1741 = vand.u32 %v1288, 4294901760
    %v1742 = vsub.f32 %v1288, %v1741
    %1743 = vmatpush1.msra.mxu0 %v1742
    %1744 = vmatprep.subr.mxu0 0.0
    %v1745 = vand.u32 %v1289, 4294901760
    %v1746 = vsub.f32 %v1289, %v1745
    %1747 = vmatpush1.msra.mxu0 %v1746
    %1748 = vmatprep.subr.mxu0 0.0
    %v1749 = vand.u32 %v1290, 4294901760
    %v1750 = vsub.f32 %v1290, %v1749
    %1751 = vmatpush1.msra.mxu0 %v1750
    %1752 = vmatprep.subr.mxu0 0.0
    %v1753 = vand.u32 %v1291, 4294901760
    %v1754 = vsub.f32 %v1291, %v1753
    %1755 = vmatpush1.msra.mxu0 %v1754
    %1756 = vmatprep.subr.mxu0 0.0
    %v1757 = vand.u32 %v1292, 4294901760
    %v1758 = vsub.f32 %v1292, %v1757
    %1759 = vmatpush1.msra.mxu0 %v1758
    %1760 = vmatprep.subr.mxu0 0.0
    %v1761 = vand.u32 %v1293, 4294901760
    %v1762 = vsub.f32 %v1293, %v1761
    %1763 = vmatpush1.msra.mxu0 %v1762
    %1764 = vmatprep.subr.mxu0 0.0
    %v1765 = vand.u32 %v1294, 4294901760
    %v1766 = vsub.f32 %v1294, %v1765
    %1767 = vmatpush1.msra.mxu0 %v1766
    %1768 = vmatprep.subr.mxu0 0.0
    %v1769 = vand.u32 %v1295, 4294901760
    %v1770 = vsub.f32 %v1295, %v1769
    %1771 = vmatpush1.msra.mxu0 %v1770
    %1772 = vmatprep.subr.mxu0 0.0
    %v1773 = vand.u32 %v1296, 4294901760
    %v1774 = vsub.f32 %v1296, %v1773
    %1775 = vmatpush1.msra.mxu0 %v1774
    %1776 = vmatprep.subr.mxu0 0.0
    %v1777 = vand.u32 %v1297, 4294901760
    %v1778 = vsub.f32 %v1297, %v1777
    %1779 = vmatpush1.msra.mxu0 %v1778
    %1780 = vmatprep.subr.mxu0 0.0
    %v1781 = vand.u32 %v1298, 4294901760
    %v1782 = vsub.f32 %v1298, %v1781
    %1783 = vmatpush1.msra.mxu0 %v1782
    %1784 = vmatprep.subr.mxu0 0.0
    %v1785 = vand.u32 %v1299, 4294901760
    %v1786 = vsub.f32 %v1299, %v1785
    %1787 = vmatpush1.msra.mxu0 %v1786
    %1788 = vmatprep.subr.mxu0 0.0
    %v1789 = vand.u32 %v1300, 4294901760
    %v1790 = vsub.f32 %v1300, %v1789
    %1791 = vmatpush1.msra.mxu0 %v1790
    %1792 = vmatprep.subr.mxu0 0.0
    %v1793 = vand.u32 %v1301, 4294901760
    %v1794 = vsub.f32 %v1301, %v1793
    %1795 = vmatpush1.msra.mxu0 %v1794
    %1796 = vmatprep.subr.mxu0 0.0
    %v1797 = vand.u32 %v1302, 4294901760
    %v1798 = vsub.f32 %v1302, %v1797
    %1799 = vmatpush1.msra.mxu0 %v1798
    %1800 = vmatprep.subr.mxu0 0.0
    %v1801 = vand.u32 %v1303, 4294901760
    %v1802 = vsub.f32 %v1303, %v1801
    %1803 = vmatpush1.msra.mxu0 %v1802
    %1804 = vmatprep.subr.mxu0 0.0
    %v1805 = vand.u32 %v1304, 4294901760
    %v1806 = vsub.f32 %v1304, %v1805
    %1807 = vmatpush1.msra.mxu0 %v1806
    %1808 = vmatprep.subr.mxu0 0.0
    %v1809 = vand.u32 %v1305, 4294901760
    %v1810 = vsub.f32 %v1305, %v1809
    %1811 = vmatpush1.msra.mxu0 %v1810
    %1812 = vmatprep.subr.mxu0 0.0
    %v1813 = vand.u32 %v1306, 4294901760
    %v1814 = vsub.f32 %v1306, %v1813
    %1815 = vmatpush1.msra.mxu0 %v1814
    %1816 = vmatprep.subr.mxu0 0.0
    %v1817 = vand.u32 %v1307, 4294901760
    %v1818 = vsub.f32 %v1307, %v1817
    %1819 = vmatpush1.msra.mxu0 %v1818
    %1820 = vmatprep.subr.mxu0 0.0
    %v1821 = vand.u32 %v1308, 4294901760
    %v1822 = vsub.f32 %v1308, %v1821
    %1823 = vmatpush1.msra.mxu0 %v1822
    %1824 = vmatprep.subr.mxu0 0.0
    %v1825 = vand.u32 %v1309, 4294901760
    %v1826 = vsub.f32 %v1309, %v1825
    %1827 = vmatpush1.msra.mxu0 %v1826
    %1828 = vmatprep.subr.mxu0 0.0
    %v1829 = vand.u32 %v1310, 4294901760
    %v1830 = vsub.f32 %v1310, %v1829
    %1831 = vmatpush1.msra.mxu0 %v1830
    %1832 = vmatprep.subr.mxu0 0.0
    %v1833 = vand.u32 %v1311, 4294901760
    %v1834 = vsub.f32 %v1311, %v1833
    %1835 = vmatpush1.msra.mxu0 %v1834
    %1836 = vmatprep.subr.mxu0 0.0
    %v1837 = vand.u32 %v1312, 4294901760
    %v1838 = vsub.f32 %v1312, %v1837
    %1839 = vmatpush1.msra.mxu0 %v1838
    %1840 = vmatprep.subr.mxu0 0.0
    %v1841 = vand.u32 %v1313, 4294901760
    %v1842 = vsub.f32 %v1313, %v1841
    %1843 = vmatpush1.msra.mxu0 %v1842
    %1844 = vmatprep.subr.mxu0 0.0
    %v1845 = vand.u32 %v1314, 4294901760
    %v1846 = vsub.f32 %v1314, %v1845
    %1847 = vmatpush1.msra.mxu0 %v1846
    %1848 = vmatprep.subr.mxu0 0.0
    %v1849 = vand.u32 %v1315, 4294901760
    %v1850 = vsub.f32 %v1315, %v1849
    %1851 = vmatpush1.msra.mxu0 %v1850
    %1852 = vmatprep.subr.mxu0 0.0
    %v1853 = vand.u32 %v1316, 4294901760
    %v1854 = vsub.f32 %v1316, %v1853
    %1855 = vmatpush1.msra.mxu0 %v1854
    %1856 = vmatprep.subr.mxu0 0.0
    %v1857 = vand.u32 %v1317, 4294901760
    %v1858 = vsub.f32 %v1317, %v1857
    %1859 = vmatpush1.msra.mxu0 %v1858
    %1860 = vmatprep.subr.mxu0 0.0
    %v1861 = vand.u32 %v1318, 4294901760
    %v1862 = vsub.f32 %v1318, %v1861
    %1863 = vmatpush1.msra.mxu0 %v1862
    %v1864 = vand.u32 %v1280, 4294901760
    %v1865 = vsub.f32 %v1280, %v1864
    %1866 = vmatprep.mubr.f32.mxu0 %v1865
    %v1867 = vand.u32 %v1279, 4294901760
    %v1868 = vsub.f32 %v1279, %v1867
    %1869 = vmatmul.mubr.f32.gmra.mrb[0].mxu0 %v1868
    %v1870 = vpop.f32.mrb[0].mxu0
    %v1871 = vadd.f32 %v1712, %v1870
    %v1872 = vpop.f32.mrb[0].mxu0
    %v1873 = vand.u32 %v1282, 4294901760
    %v1874 = vsub.f32 %v1282, %v1873
    %1875 = vmatprep.mubr.f32.mxu0 %v1874
    %v1876 = vand.u32 %v1281, 4294901760
    %v1877 = vsub.f32 %v1281, %v1876
    %1878 = vmatmul.mubr.f32.gmra.mrb[0].mxu0 %v1877
    %v1879 = vpop.f32.mrb[0].mxu0
    %v1880 = vadd.f32 %v1719, %v1879
    %v1881 = vpop.f32.mrb[0].mxu0
    %v1882 = vand.u32 %v1284, 4294901760
    %v1883 = vsub.f32 %v1284, %v1882
    %1884 = vmatprep.mubr.f32.mxu0 %v1883
    %v1885 = vand.u32 %v1283, 4294901760
    %v1886 = vsub.f32 %v1283, %v1885
    %1887 = vmatmul.mubr.f32.gmra.mrb[0].mxu0 %v1886
    %v1888 = vpop.f32.mrb[0].mxu0
    %v1889 = vadd.f32 %v1726, %v1888
    %v1890 = vpop.f32.mrb[0].mxu0
    %v1891 = vand.u32 %v1286, 4294901760
    %v1892 = vsub.f32 %v1286, %v1891
    %1893 = vmatprep.mubr.f32.mxu0 %v1892
    %v1894 = vand.u32 %v1285, 4294901760
    %v1895 = vsub.f32 %v1285, %v1894
    %1896 = vmatmul.mubr.f32.gmra.mrb[0].mxu0 %v1895
    %v1897 = vpop.f32.mrb[0].mxu0
    %v1898 = vadd.f32 %v1733, %v1897
    %v1899 = vpop.f32.mrb[0].mxu0
    %1900 = vdwg.mxu0
    %1901 = vmatprep.subr.mxu0 0.0
    %v1902 = vand.u32 %v1287, 4294901760
    %1903 = vmatpush1.msra.mxu0 %v1902
    %1904 = vmatprep.subr.mxu0 0.0
    %v1905 = vand.u32 %v1288, 4294901760
    %1906 = vmatpush1.msra.mxu0 %v1905
    %1907 = vmatprep.subr.mxu0 0.0
    %v1908 = vand.u32 %v1289, 4294901760
    %1909 = vmatpush1.msra.mxu0 %v1908
    %1910 = vmatprep.subr.mxu0 0.0
    %v1911 = vand.u32 %v1290, 4294901760
    %1912 = vmatpush1.msra.mxu0 %v1911
    %1913 = vmatprep.subr.mxu0 0.0
    %v1914 = vand.u32 %v1291, 4294901760
    %1915 = vmatpush1.msra.mxu0 %v1914
    %1916 = vmatprep.subr.mxu0 0.0
    %v1917 = vand.u32 %v1292, 4294901760
    %1918 = vmatpush1.msra.mxu0 %v1917
    %1919 = vmatprep.subr.mxu0 0.0
    %v1920 = vand.u32 %v1293, 4294901760
    %1921 = vmatpush1.msra.mxu0 %v1920
    %1922 = vmatprep.subr.mxu0 0.0
    %v1923 = vand.u32 %v1294, 4294901760
    %1924 = vmatpush1.msra.mxu0 %v1923
    %1925 = vmatprep.subr.mxu0 0.0
    %v1926 = vand.u32 %v1295, 4294901760
    %1927 = vmatpush1.msra.mxu0 %v1926
    %1928 = vmatprep.subr.mxu0 0.0
    %v1929 = vand.u32 %v1296, 4294901760
    %1930 = vmatpush1.msra.mxu0 %v1929
    %1931 = vmatprep.subr.mxu0 0.0
    %v1932 = vand.u32 %v1297, 4294901760
    %1933 = vmatpush1.msra.mxu0 %v1932
    %1934 = vmatprep.subr.mxu0 0.0
    %v1935 = vand.u32 %v1298, 4294901760
    %1936 = vmatpush1.msra.mxu0 %v1935
    %1937 = vmatprep.subr.mxu0 0.0
    %v1938 = vand.u32 %v1299, 4294901760
    %1939 = vmatpush1.msra.mxu0 %v1938
    %1940 = vmatprep.subr.mxu0 0.0
    %v1941 = vand.u32 %v1300, 4294901760
    %1942 = vmatpush1.msra.mxu0 %v1941
    %1943 = vmatprep.subr.mxu0 0.0
    %v1944 = vand.u32 %v1301, 4294901760
    %1945 = vmatpush1.msra.mxu0 %v1944
    %1946 = vmatprep.subr.mxu0 0.0
    %v1947 = vand.u32 %v1302, 4294901760
    %1948 = vmatpush1.msra.mxu0 %v1947
    %1949 = vmatprep.subr.mxu0 0.0
    %v1950 = vand.u32 %v1303, 4294901760
    %1951 = vmatpush1.msra.mxu0 %v1950
    %1952 = vmatprep.subr.mxu0 0.0
    %v1953 = vand.u32 %v1304, 4294901760
    %1954 = vmatpush1.msra.mxu0 %v1953
    %1955 = vmatprep.subr.mxu0 0.0
    %v1956 = vand.u32 %v1305, 4294901760
    %1957 = vmatpush1.msra.mxu0 %v1956
    %1958 = vmatprep.subr.mxu0 0.0
    %v1959 = vand.u32 %v1306, 4294901760
    %1960 = vmatpush1.msra.mxu0 %v1959
    %1961 = vmatprep.subr.mxu0 0.0
    %v1962 = vand.u32 %v1307, 4294901760
    %1963 = vmatpush1.msra.mxu0 %v1962
    %1964 = vmatprep.subr.mxu0 0.0
    %v1965 = vand.u32 %v1308, 4294901760
    %1966 = vmatpush1.msra.mxu0 %v1965
    %1967 = vmatprep.subr.mxu0 0.0
    %v1968 = vand.u32 %v1309, 4294901760
    %1969 = vmatpush1.msra.mxu0 %v1968
    %1970 = vmatprep.subr.mxu0 0.0
    %v1971 = vand.u32 %v1310, 4294901760
    %1972 = vmatpush1.msra.mxu0 %v1971
    %1973 = vmatprep.subr.mxu0 0.0
    %v1974 = vand.u32 %v1311, 4294901760
    %1975 = vmatpush1.msra.mxu0 %v1974
    %1976 = vmatprep.subr.mxu0 0.0
    %v1977 = vand.u32 %v1312, 4294901760
    %1978 = vmatpush1.msra.mxu0 %v1977
    %1979 = vmatprep.subr.mxu0 0.0
    %v1980 = vand.u32 %v1313, 4294901760
    %1981 = vmatpush1.msra.mxu0 %v1980
    %1982 = vmatprep.subr.mxu0 0.0
    %v1983 = vand.u32 %v1314, 4294901760
    %1984 = vmatpush1.msra.mxu0 %v1983
    %1985 = vmatprep.subr.mxu0 0.0
    %v1986 = vand.u32 %v1315, 4294901760
    %1987 = vmatpush1.msra.mxu0 %v1986
    %1988 = vmatprep.subr.mxu0 0.0
    %v1989 = vand.u32 %v1316, 4294901760
    %1990 = vmatpush1.msra.mxu0 %v1989
    %1991 = vmatprep.subr.mxu0 0.0
    %v1992 = vand.u32 %v1317, 4294901760
    %1993 = vmatpush1.msra.mxu0 %v1992
    %1994 = vmatprep.subr.mxu0 0.0
    %v1995 = vand.u32 %v1318, 4294901760
    %1996 = vmatpush1.msra.mxu0 %v1995
    %v1997 = vand.u32 %v1280, 4294901760
    %v1998 = vsub.f32 %v1280, %v1997
    %v1999 = vand.u32 %v1998, 4294901760
    %2000 = vmatprep.mubr.f32.mxu0 %v1999
    %v2001 = vand.u32 %v1279, 4294901760
    %v2002 = vsub.f32 %v1279, %v2001
    %v2003 = vand.u32 %v2002, 4294901760
    %2004 = vmatmul.mubr.f32.gmra.mrb[0].mxu0 %v2003
    %v2005 = vpop.f32.mrb[0].mxu0
    %v2006 = vadd.f32 %v1871, %v2005
    %v2007 = vpop.f32.mrb[0].mxu0
    %v2008 = vand.u32 %v1282, 4294901760
    %v2009 = vsub.f32 %v1282, %v2008
    %v2010 = vand.u32 %v2009, 4294901760
    %2011 = vmatprep.mubr.f32.mxu0 %v2010
    %v2012 = vand.u32 %v1281, 4294901760
    %v2013 = vsub.f32 %v1281, %v2012
    %v2014 = vand.u32 %v2013, 4294901760
    %2015 = vmatmul.mubr.f32.gmra.mrb[0].mxu0 %v2014
    %v2016 = vpop.f32.mrb[0].mxu0
    %v2017 = vadd.f32 %v1880, %v2016
    %v2018 = vpop.f32.mrb[0].mxu0
    %v2019 = vand.u32 %v1284, 4294901760
    %v2020 = vsub.f32 %v1284, %v2019
    %v2021 = vand.u32 %v2020, 4294901760
    %2022 = vmatprep.mubr.f32.mxu0 %v2021
    %v2023 = vand.u32 %v1283, 4294901760
    %v2024 = vsub.f32 %v1283, %v2023
    %v2025 = vand.u32 %v2024, 4294901760
    %2026 = vmatmul.mubr.f32.gmra.mrb[0].mxu0 %v2025
    %v2027 = vpop.f32.mrb[0].mxu0
    %v2028 = vadd.f32 %v1889, %v2027
    %v2029 = vpop.f32.mrb[0].mxu0
    %v2030 = vand.u32 %v1286, 4294901760
    %v2031 = vsub.f32 %v1286, %v2030
    %v2032 = vand.u32 %v2031, 4294901760
    %2033 = vmatprep.mubr.f32.mxu0 %v2032
    %v2034 = vand.u32 %v1285, 4294901760
    %v2035 = vsub.f32 %v1285, %v2034
    %v2036 = vand.u32 %v2035, 4294901760
    %2037 = vmatmul.mubr.f32.gmra.mrb[0].mxu0 %v2036
    %v2038 = vpop.f32.mrb[0].mxu0
    %v2039 = vadd.f32 %v1898, %v2038
    %v2040 = vpop.f32.mrb[0].mxu0
    %2041 = vdwg.mxu0
    %2042 = vmatprep.subr.mxu0 0.0
    %v2043 = vand.u32 %v1287, 4294901760
    %v2044 = vsub.f32 %v1287, %v2043
    %v2045 = vand.u32 %v2044, 4294901760
    %2046 = vmatpush1.msra.mxu0 %v2045
    %2047 = vmatprep.subr.mxu0 0.0
    %v2048 = vand.u32 %v1288, 4294901760
    %v2049 = vsub.f32 %v1288, %v2048
    %v2050 = vand.u32 %v2049, 4294901760
    %2051 = vmatpush1.msra.mxu0 %v2050
    %2052 = vmatprep.subr.mxu0 0.0
    %v2053 = vand.u32 %v1289, 4294901760
    %v2054 = vsub.f32 %v1289, %v2053
    %v2055 = vand.u32 %v2054, 4294901760
    %2056 = vmatpush1.msra.mxu0 %v2055
    %2057 = vmatprep.subr.mxu0 0.0
    %v2058 = vand.u32 %v1290, 4294901760
    %v2059 = vsub.f32 %v1290, %v2058
    %v2060 = vand.u32 %v2059, 4294901760
    %2061 = vmatpush1.msra.mxu0 %v2060
    %2062 = vmatprep.subr.mxu0 0.0
    %v2063 = vand.u32 %v1291, 4294901760
    %v2064 = vsub.f32 %v1291, %v2063
    %v2065 = vand.u32 %v2064, 4294901760
    %2066 = vmatpush1.msra.mxu0 %v2065
    %2067 = vmatprep.subr.mxu0 0.0
    %v2068 = vand.u32 %v1292, 4294901760
    %v2069 = vsub.f32 %v1292, %v2068
    %v2070 = vand.u32 %v2069, 4294901760
    %2071 = vmatpush1.msra.mxu0 %v2070
    %2072 = vmatprep.subr.mxu0 0.0
    %v2073 = vand.u32 %v1293, 4294901760
    %v2074 = vsub.f32 %v1293, %v2073
    %v2075 = vand.u32 %v2074, 4294901760
    %2076 = vmatpush1.msra.mxu0 %v2075
    %2077 = vmatprep.subr.mxu0 0.0
    %v2078 = vand.u32 %v1294, 4294901760
    %v2079 = vsub.f32 %v1294, %v2078
    %v2080 = vand.u32 %v2079, 4294901760
    %2081 = vmatpush1.msra.mxu0 %v2080
    %2082 = vmatprep.subr.mxu0 0.0
    %v2083 = vand.u32 %v1295, 4294901760
    %v2084 = vsub.f32 %v1295, %v2083
    %v2085 = vand.u32 %v2084, 4294901760
    %2086 = vmatpush1.msra.mxu0 %v2085
    %2087 = vmatprep.subr.mxu0 0.0
    %v2088 = vand.u32 %v1296, 4294901760
    %v2089 = vsub.f32 %v1296, %v2088
    %v2090 = vand.u32 %v2089, 4294901760
    %2091 = vmatpush1.msra.mxu0 %v2090
    %2092 = vmatprep.subr.mxu0 0.0
    %v2093 = vand.u32 %v1297, 4294901760
    %v2094 = vsub.f32 %v1297, %v2093
    %v2095 = vand.u32 %v2094, 4294901760
    %2096 = vmatpush1.msra.mxu0 %v2095
    %2097 = vmatprep.subr.mxu0 0.0
    %v2098 = vand.u32 %v1298, 4294901760
    %v2099 = vsub.f32 %v1298, %v2098
    %v2100 = vand.u32 %v2099, 4294901760
    %2101 = vmatpush1.msra.mxu0 %v2100
    %2102 = vmatprep.subr.mxu0 0.0
    %v2103 = vand.u32 %v1299, 4294901760
    %v2104 = vsub.f32 %v1299, %v2103
    %v2105 = vand.u32 %v2104, 4294901760
    %2106 = vmatpush1.msra.mxu0 %v2105
    %2107 = vmatprep.subr.mxu0 0.0
    %v2108 = vand.u32 %v1300, 4294901760
    %v2109 = vsub.f32 %v1300, %v2108
    %v2110 = vand.u32 %v2109, 4294901760
    %2111 = vmatpush1.msra.mxu0 %v2110
    %2112 = vmatprep.subr.mxu0 0.0
    %v2113 = vand.u32 %v1301, 4294901760
    %v2114 = vsub.f32 %v1301, %v2113
    %v2115 = vand.u32 %v2114, 4294901760
    %2116 = vmatpush1.msra.mxu0 %v2115
    %2117 = vmatprep.subr.mxu0 0.0
    %v2118 = vand.u32 %v1302, 4294901760
    %v2119 = vsub.f32 %v1302, %v2118
    %v2120 = vand.u32 %v2119, 4294901760
    %2121 = vmatpush1.msra.mxu0 %v2120
    %2122 = vmatprep.subr.mxu0 0.0
    %v2123 = vand.u32 %v1303, 4294901760
    %v2124 = vsub.f32 %v1303, %v2123
    %v2125 = vand.u32 %v2124, 4294901760
    %2126 = vmatpush1.msra.mxu0 %v2125
    %2127 = vmatprep.subr.mxu0 0.0
    %v2128 = vand.u32 %v1304, 4294901760
    %v2129 = vsub.f32 %v1304, %v2128
    %v2130 = vand.u32 %v2129, 4294901760
    %2131 = vmatpush1.msra.mxu0 %v2130
    %2132 = vmatprep.subr.mxu0 0.0
    %v2133 = vand.u32 %v1305, 4294901760
    %v2134 = vsub.f32 %v1305, %v2133
    %v2135 = vand.u32 %v2134, 4294901760
    %2136 = vmatpush1.msra.mxu0 %v2135
    %2137 = vmatprep.subr.mxu0 0.0
    %v2138 = vand.u32 %v1306, 4294901760
    %v2139 = vsub.f32 %v1306, %v2138
    %v2140 = vand.u32 %v2139, 4294901760
    %2141 = vmatpush1.msra.mxu0 %v2140
    %2142 = vmatprep.subr.mxu0 0.0
    %v2143 = vand.u32 %v1307, 4294901760
    %v2144 = vsub.f32 %v1307, %v2143
    %v2145 = vand.u32 %v2144, 4294901760
    %2146 = vmatpush1.msra.mxu0 %v2145
    %2147 = vmatprep.subr.mxu0 0.0
    %v2148 = vand.u32 %v1308, 4294901760
    %v2149 = vsub.f32 %v1308, %v2148
    %v2150 = vand.u32 %v2149, 4294901760
    %2151 = vmatpush1.msra.mxu0 %v2150
    %2152 = vmatprep.subr.mxu0 0.0
    %v2153 = vand.u32 %v1309, 4294901760
    %v2154 = vsub.f32 %v1309, %v2153
    %v2155 = vand.u32 %v2154, 4294901760
    %2156 = vmatpush1.msra.mxu0 %v2155
    %2157 = vmatprep.subr.mxu0 0.0
    %v2158 = vand.u32 %v1310, 4294901760
    %v2159 = vsub.f32 %v1310, %v2158
    %v2160 = vand.u32 %v2159, 4294901760
    %2161 = vmatpush1.msra.mxu0 %v2160
    %2162 = vmatprep.subr.mxu0 0.0
    %v2163 = vand.u32 %v1311, 4294901760
    %v2164 = vsub.f32 %v1311, %v2163
    %v2165 = vand.u32 %v2164, 4294901760
    %2166 = vmatpush1.msra.mxu0 %v2165
    %2167 = vmatprep.subr.mxu0 0.0
    %v2168 = vand.u32 %v1312, 4294901760
    %v2169 = vsub.f32 %v1312, %v2168
    %v2170 = vand.u32 %v2169, 4294901760
    %2171 = vmatpush1.msra.mxu0 %v2170
    %2172 = vmatprep.subr.mxu0 0.0
    %v2173 = vand.u32 %v1313, 4294901760
    %v2174 = vsub.f32 %v1313, %v2173
    %v2175 = vand.u32 %v2174, 4294901760
    %2176 = vmatpush1.msra.mxu0 %v2175
    %2177 = vmatprep.subr.mxu0 0.0
    %v2178 = vand.u32 %v1314, 4294901760
    %v2179 = vsub.f32 %v1314, %v2178
    %v2180 = vand.u32 %v2179, 4294901760
    %2181 = vmatpush1.msra.mxu0 %v2180
    %2182 = vmatprep.subr.mxu0 0.0
    %v2183 = vand.u32 %v1315, 4294901760
    %v2184 = vsub.f32 %v1315, %v2183
    %v2185 = vand.u32 %v2184, 4294901760
    %2186 = vmatpush1.msra.mxu0 %v2185
    %2187 = vmatprep.subr.mxu0 0.0
    %v2188 = vand.u32 %v1316, 4294901760
    %v2189 = vsub.f32 %v1316, %v2188
    %v2190 = vand.u32 %v2189, 4294901760
    %2191 = vmatpush1.msra.mxu0 %v2190
    %2192 = vmatprep.subr.mxu0 0.0
    %v2193 = vand.u32 %v1317, 4294901760
    %v2194 = vsub.f32 %v1317, %v2193
    %v2195 = vand.u32 %v2194, 4294901760
    %2196 = vmatpush1.msra.mxu0 %v2195
    %2197 = vmatprep.subr.mxu0 0.0
    %v2198 = vand.u32 %v1318, 4294901760
    %v2199 = vsub.f32 %v1318, %v2198
    %v2200 = vand.u32 %v2199, 4294901760
    %2201 = vmatpush1.msra.mxu0 %v2200
    %v2202 = vand.u32 %v1280, 4294901760
    %2203 = vmatprep.mubr.f32.mxu0 %v2202
    %v2204 = vand.u32 %v1279, 4294901760
    %2205 = vmatmul.mubr.f32.gmra.mrb[0].mxu0 %v2204
    %v2206 = vpop.f32.mrb[0].mxu0
    %v2207 = vadd.f32 %v2006, %v2206
    %v2208 = vpop.f32.mrb[0].mxu0
    %v2209 = vand.u32 %v1282, 4294901760
    %2210 = vmatprep.mubr.f32.mxu0 %v2209
    %v2211 = vand.u32 %v1281, 4294901760
    %2212 = vmatmul.mubr.f32.gmra.mrb[0].mxu0 %v2211
    %v2213 = vpop.f32.mrb[0].mxu0
    %v2214 = vadd.f32 %v2017, %v2213
    %v2215 = vpop.f32.mrb[0].mxu0
    %v2216 = vand.u32 %v1284, 4294901760
    %2217 = vmatprep.mubr.f32.mxu0 %v2216
    %v2218 = vand.u32 %v1283, 4294901760
    %2219 = vmatmul.mubr.f32.gmra.mrb[0].mxu0 %v2218
    %v2220 = vpop.f32.mrb[0].mxu0
    %v2221 = vadd.f32 %v2028, %v2220
    %v2222 = vpop.f32.mrb[0].mxu0
    %v2223 = vand.u32 %v1286, 4294901760
    %2224 = vmatprep.mubr.f32.mxu0 %v2223
    %v2225 = vand.u32 %v1285, 4294901760
    %2226 = vmatmul.mubr.f32.gmra.mrb[0].mxu0 %v2225
    %v2227 = vpop.f32.mrb[0].mxu0
    %v2228 = vadd.f32 %v2039, %v2227
    %v2229 = vpop.f32.mrb[0].mxu0
    %2230 = vdwg.mxu0
    %2231 = vmatprep.subr.mxu0 0.0
    %v2232 = vand.u32 %v1287, 4294901760
    %2233 = vmatpush1.msra.mxu0 %v2232
    %2234 = vmatprep.subr.mxu0 0.0
    %v2235 = vand.u32 %v1288, 4294901760
    %2236 = vmatpush1.msra.mxu0 %v2235
    %2237 = vmatprep.subr.mxu0 0.0
    %v2238 = vand.u32 %v1289, 4294901760
    %2239 = vmatpush1.msra.mxu0 %v2238
    %2240 = vmatprep.subr.mxu0 0.0
    %v2241 = vand.u32 %v1290, 4294901760
    %2242 = vmatpush1.msra.mxu0 %v2241
    %2243 = vmatprep.subr.mxu0 0.0
    %v2244 = vand.u32 %v1291, 4294901760
    %2245 = vmatpush1.msra.mxu0 %v2244
    %2246 = vmatprep.subr.mxu0 0.0
    %v2247 = vand.u32 %v1292, 4294901760
    %2248 = vmatpush1.msra.mxu0 %v2247
    %2249 = vmatprep.subr.mxu0 0.0
    %v2250 = vand.u32 %v1293, 4294901760
    %2251 = vmatpush1.msra.mxu0 %v2250
    %2252 = vmatprep.subr.mxu0 0.0
    %v2253 = vand.u32 %v1294, 4294901760
    %2254 = vmatpush1.msra.mxu0 %v2253
    %2255 = vmatprep.subr.mxu0 0.0
    %v2256 = vand.u32 %v1295, 4294901760
    %2257 = vmatpush1.msra.mxu0 %v2256
    %2258 = vmatprep.subr.mxu0 0.0
    %v2259 = vand.u32 %v1296, 4294901760
    %2260 = vmatpush1.msra.mxu0 %v2259
    %2261 = vmatprep.subr.mxu0 0.0
    %v2262 = vand.u32 %v1297, 4294901760
    %2263 = vmatpush1.msra.mxu0 %v2262
    %2264 = vmatprep.subr.mxu0 0.0
    %v2265 = vand.u32 %v1298, 4294901760
    %2266 = vmatpush1.msra.mxu0 %v2265
    %2267 = vmatprep.subr.mxu0 0.0
    %v2268 = vand.u32 %v1299, 4294901760
    %2269 = vmatpush1.msra.mxu0 %v2268
    %2270 = vmatprep.subr.mxu0 0.0
    %v2271 = vand.u32 %v1300, 4294901760
    %2272 = vmatpush1.msra.mxu0 %v2271
    %2273 = vmatprep.subr.mxu0 0.0
    %v2274 = vand.u32 %v1301, 4294901760
    %2275 = vmatpush1.msra.mxu0 %v2274
    %2276 = vmatprep.subr.mxu0 0.0
    %v2277 = vand.u32 %v1302, 4294901760
    %2278 = vmatpush1.msra.mxu0 %v2277
    %2279 = vmatprep.subr.mxu0 0.0
    %v2280 = vand.u32 %v1303, 4294901760
    %2281 = vmatpush1.msra.mxu0 %v2280
    %2282 = vmatprep.subr.mxu0 0.0
    %v2283 = vand.u32 %v1304, 4294901760
    %2284 = vmatpush1.msra.mxu0 %v2283
    %2285 = vmatprep.subr.mxu0 0.0
    %v2286 = vand.u32 %v1305, 4294901760
    %2287 = vmatpush1.msra.mxu0 %v2286
    %2288 = vmatprep.subr.mxu0 0.0
    %v2289 = vand.u32 %v1306, 4294901760
    %2290 = vmatpush1.msra.mxu0 %v2289
    %2291 = vmatprep.subr.mxu0 0.0
    %v2292 = vand.u32 %v1307, 4294901760
    %2293 = vmatpush1.msra.mxu0 %v2292
    %2294 = vmatprep.subr.mxu0 0.0
    %v2295 = vand.u32 %v1308, 4294901760
    %2296 = vmatpush1.msra.mxu0 %v2295
    %2297 = vmatprep.subr.mxu0 0.0
    %v2298 = vand.u32 %v1309, 4294901760
    %2299 = vmatpush1.msra.mxu0 %v2298
    %2300 = vmatprep.subr.mxu0 0.0
    %v2301 = vand.u32 %v1310, 4294901760
    %2302 = vmatpush1.msra.mxu0 %v2301
    %2303 = vmatprep.subr.mxu0 0.0
    %v2304 = vand.u32 %v1311, 4294901760
    %2305 = vmatpush1.msra.mxu0 %v2304
    %2306 = vmatprep.subr.mxu0 0.0
    %v2307 = vand.u32 %v1312, 4294901760
    %2308 = vmatpush1.msra.mxu0 %v2307
    %2309 = vmatprep.subr.mxu0 0.0
    %v2310 = vand.u32 %v1313, 4294901760
    %2311 = vmatpush1.msra.mxu0 %v2310
    %2312 = vmatprep.subr.mxu0 0.0
    %v2313 = vand.u32 %v1314, 4294901760
    %2314 = vmatpush1.msra.mxu0 %v2313
    %2315 = vmatprep.subr.mxu0 0.0
    %v2316 = vand.u32 %v1315, 4294901760
    %2317 = vmatpush1.msra.mxu0 %v2316
    %2318 = vmatprep.subr.mxu0 0.0
    %v2319 = vand.u32 %v1316, 4294901760
    %2320 = vmatpush1.msra.mxu0 %v2319
    %2321 = vmatprep.subr.mxu0 0.0
    %v2322 = vand.u32 %v1317, 4294901760
    %2323 = vmatpush1.msra.mxu0 %v2322
    %2324 = vmatprep.subr.mxu0 0.0
    %v2325 = vand.u32 %v1318, 4294901760
    %2326 = vmatpush1.msra.mxu0 %v2325
    %v2327 = vand.u32 %v1280, 4294901760
    %2328 = vmatprep.mubr.f32.mxu0 %v2327
    %v2329 = vand.u32 %v1279, 4294901760
    %2330 = vmatmul.mubr.f32.gmra.mrb[0].mxu0 %v2329
    %v2331 = vpop.f32.mrb[0].mxu0
    %v2332 = vadd.f32 %v2207, %v2331
    %v2333 = vpop.f32.mrb[0].mxu0
    %v2334 = vand.u32 %v1282, 4294901760
    %2335 = vmatprep.mubr.f32.mxu0 %v2334
    %v2336 = vand.u32 %v1281, 4294901760
    %2337 = vmatmul.mubr.f32.gmra.mrb[0].mxu0 %v2336
    %v2338 = vpop.f32.mrb[0].mxu0
    %v2339 = vadd.f32 %v2214, %v2338
    %v2340 = vpop.f32.mrb[0].mxu0
    %v2341 = vand.u32 %v1284, 4294901760
    %2342 = vmatprep.mubr.f32.mxu0 %v2341
    %v2343 = vand.u32 %v1283, 4294901760
    %2344 = vmatmul.mubr.f32.gmra.mrb[0].mxu0 %v2343
    %v2345 = vpop.f32.mrb[0].mxu0
    %v2346 = vadd.f32 %v2221, %v2345
    %v2347 = vpop.f32.mrb[0].mxu0
    %v2348 = vand.u32 %v1286, 4294901760
    %2349 = vmatprep.mubr.f32.mxu0 %v2348
    %v2350 = vand.u32 %v1285, 4294901760
    %2351 = vmatmul.mubr.f32.gmra.mrb[0].mxu0 %v2350
    %v2352 = vpop.f32.mrb[0].mxu0
    %v2353 = vadd.f32 %v2228, %v2352
    %v2354 = vpop.f32.mrb[0].mxu0
    %2355 = vdwg.mxu0
    %vm2356 = vcmp.gt.f32.partialorder %v215, 0.0
    %vm2357 = vcmp.gt.f32.partialorder %v220, 0.0
    %vm2358 = vcmp.gt.f32.partialorder %v225, 0.0
    %vm2359 = vcmp.gt.f32.partialorder %v230, 0.0
    %v2360 = vsel %vm2356, nan, %v2332
    %v2361 = vsel %vm2357, nan, %v2339
    %v2362 = vsel %vm2358, nan, %v2346
    %v2363 = vsel %vm2359, nan, %v2353
    %v2364 = vld [vmem:[#allocation5] sm:$0xff]
    %v2365 = vunpack.c.0.s8 %v2364
    %v2366 = vunpack.c.1.s8 %v2364
    %v2367 = vunpack.c.2.s8 %v2364
    %v2368 = vunpack.c.3.s8 %v2364
    %v2369 = vcvt.s32.f32 %v2365
    %v2370 = vcvt.s32.f32 %v2366
    %v2371 = vcvt.s32.f32 %v2367
    %v2372 = vcvt.s32.f32 %v2368
    %v2373 = vsub.f32 1.0, %v2369
    %v2374 = vsub.f32 1.0, %v2370
    %v2375 = vsub.f32 1.0, %v2371
    %v2376 = vsub.f32 1.0, %v2372
    %2377 = vst [vmem:[#allocation11] sm:$0xff] %v2360
    %2378 = vst [vmem:[#allocation11 + $0x8] sm:$0xff] %v2361
    %2379 = vst [vmem:[#allocation11 + $0x10] sm:$0xff] %v2362
    %2380 = vst [vmem:[#allocation11 + $0x18] sm:$0xff] %v2363
    %v2381 = vmul.f32 %v2360, %v2373
    %v2382 = vmul.f32 %v2361, %v2374
    %v2383 = vmul.f32 %v2362, %v2375
    %v2384 = vmul.f32 %v2363, %v2376
    %v2385 = vadd.f32 %v2381, %v120
    %v2386 = vadd.f32 %v2382, %v121
    %v2387 = vadd.f32 %v2383, %v122
    %v2388 = vadd.f32 %v2384, %v123
    %2389 = vst [vmem:[#allocation12] sm:$0xff] %v2385
    %2390 = vst [vmem:[#allocation12 + $0x8] sm:$0xff] %v2386
    %2391 = vst [vmem:[#allocation12 + $0x10] sm:$0xff] %v2387
    %2392 = vst [vmem:[#allocation12 + $0x18] sm:$0xff] %v2388
    // Predicated region
    $region50: #{tpu_custom_call.1} parent=1 // pred_check
      _
    $region51: #{tpu_custom_call.1} parent=1 // pred_check_branch
      %2394 = sbr.rel (0) target = $region53
    $region52: #{tpu_custom_call.1} parent=1 // pred_region
      %s2396 = ssub.s32 512, 512
      %2397 = vsyncadd [#allocation4], %s2396
      %s2398 = sshll.u32 [#allocation11], 4
      %s2399 = int_to_ptr.vmem [resolvable:$true] %s2398
      %2404 = dma.vmem_to_hbm [thread:$0]  %s2399, 512, %s7, [#allocation4], 128, 128, 8
    $region53: #{tpu_custom_call.1} parent=1 // pred_fallthru
      _
    // Predicated region
    $region54: #{tpu_custom_call.1} parent=1 // pred_check
      _
    $region55: #{tpu_custom_call.1} parent=1 // pred_check_branch
      %2406 = sbr.rel (0) target = $region57
    $region56: #{tpu_custom_call.1} parent=1 // pred_region
      %s2408 = ssub.s32 512, 512
      %2409 = vsyncadd [#allocation13], %s2408
      %s2410 = sshll.u32 [#allocation12], 4
      %s2411 = int_to_ptr.vmem [resolvable:$true] %s2410
      %2416 = dma.vmem_to_hbm [thread:$0]  %s2411, 512, %s8, [#allocation13], 128, 128, 8
    $region57: #{tpu_custom_call.1} parent=1 // pred_fallthru
      _
    // Predicated region
    $region58: #{tpu_custom_call.1} parent=1 // pred_check
      _
    $region59: #{tpu_custom_call.1} parent=1 // pred_check_branch
      %2418 = sbr.rel (0) target = $region61
    $region60: #{tpu_custom_call.1} parent=1 // pred_region
      %2419 = dma.done [#allocation4], 512
    $region61: #{tpu_custom_call.1} parent=1 // pred_fallthru
      _
    // Predicated region
    $region62: #{tpu_custom_call.1} parent=1 // pred_check
      _
    $region63: #{tpu_custom_call.1} parent=1 // pred_check_branch
      %2421 = sbr.rel (0) target = $region65
    $region64: #{tpu_custom_call.1} parent=1 // pred_region
      %2422 = dma.done [#allocation13], 512
    $region65: #{tpu_custom_call.1} parent=1 // pred_fallthru
      _
    %2423 = vsyncpa [#allocation3], 1
    %2424 = vsyncpa [#allocation6], 1
    %2425 = vsyncpa [#allocation9], 1
    %2426 = vsyncpa [#allocation4], 1
    %2427 = vsyncpa [#allocation13], 1

</llo_original>
